<compile_context>
chip_gen: v5e
topology: v5e:2x2
jax: 0.10.0
libtpu: 0.0.40
codegen_flags: <defaults>
</compile_context>

<pallas_src>
import functools

import jax
import jax.numpy as jnp
from jax.experimental import pallas as pl
from jax.experimental.pallas import tpu as pltpu

INPUT_SIZE = 9
HIDDEN = 64
NUM_CLASSES = 2
D_PAD = 16    # input feature dim padded so weight-slab row offsets are bf16-tile (16) aligned
SUBLANE = 8   # f32 sublane granularity; batch is padded to a multiple of this


# ---------------------------------------------------------------------------
# Fused kernel: 2-layer unidirectional LSTM recurrence + fc(last timestep).
# Gate order matches PyTorch: i, f, g, o.
# ---------------------------------------------------------------------------
def _lstm_trader_kernel(x2d_ref, w_ref, b_ref, out_ref, gx_scr, *, T, Bp, H):
    """x2d_ref: (T*Bp, D_PAD) bf16  time-major, batch/feature zero-padded
       w_ref:   (D_PAD + 4H, 4H) bf16 packed slab:
                  [0:D_PAD)            wih_l0 (zero-padded rows)
                  [D_PAD:D_PAD+H)      whh_l0
                  [D_PAD+H:D_PAD+3H)   [wih_l1; whh_l1]   (fused layer-1 weight)
                  [D_PAD+3H:D_PAD+4H)  fc weight, zero-padded to 4H columns
       b_ref:   (8, 4H) f32: row0 = b_ih+b_hh layer0, row1 = layer1, row2 = fc bias (padded)
       out_ref: (Bp, NUM_CLASSES) f32
       gx_scr:  (T*Bp, 4H) f32 scratch for the hoisted layer-0 input projection"""
    G = 4 * H
    # Static, tile-aligned views into the packed weight slab (kept bf16 for the MXU).
    wih0 = w_ref[0:D_PAD, :]                       # (D_PAD, 4H)
    whh0 = w_ref[D_PAD:D_PAD + H, :]               # (H, 4H)
    w1 = w_ref[D_PAD + H:D_PAD + 3 * H, :]         # (2H, 4H) fused [wih_l1; whh_l1]
    fcw = w_ref[D_PAD + 3 * H:D_PAD + 4 * H, :]    # (H, 4H), cols >= NUM_CLASSES are zero

    # Hoisted layer-0 input projection: one (T*Bp, D_PAD) x (D_PAD, 4H) matmul + bias,
    # off the serial critical path (replaces T tiny per-step matmuls + bias adds).
    gx_scr[...] = (
        jnp.dot(x2d_ref[...], wih0, preferred_element_type=jnp.float32)
        + b_ref[0:1, :]
    )

    # Hoisted bias broadcast for layer 1 (JAX does not CSE broadcast_in_dim per iter).
    bias1 = jnp.broadcast_to(b_ref[1:2, :], (Bp, G))

    def cell(gates, c):
        # One full-width sigmoid (2 vregs at H=64) + tanh on the vreg-aligned g slice.
        sg = jax.nn.sigmoid(gates)                       # (Bp, 4H)
        g = jnp.tanh(gates[:, 2 * H:3 * H])              # (Bp, H)
        i = sg[:, 0 * H:1 * H]
        f = sg[:, 1 * H:2 * H]
        o = sg[:, 3 * H:4 * H]
        c_new = f * c + i * g
        h_new = o * jnp.tanh(c_new)
        return h_new, c_new

    zeros = jnp.zeros((Bp, H), jnp.float32)
    h1, c1, h2, c2 = zeros, zeros, zeros, zeros

    # Fully unrolled time loop (T=8): static sublane-aligned slices, both layers advance
    # per step, carries stay in registers/VMEM (no HBM round trips).
    # TODO(synk): for much larger T switch to lax.fori_loop(..., unroll=4/8) with
    # pl.ds(pl.multiple_of(t * Bp, Bp), Bp) indexing of gx_scr.
    for t in range(T):
        gates1 = gx_scr[t * Bp:(t + 1) * Bp, :] + jnp.dot(
            h1.astype(jnp.bfloat16), whh0, preferred_element_type=jnp.float32)
        h1, c1 = cell(gates1, c1)

        # Fused layer-1 matmul: [h1 | h2] (Bp, 2H) against the stacked (2H, 4H) weight.
        h12 = jnp.concatenate([h1, h2], axis=1).astype(jnp.bfloat16)
        gates2 = jnp.dot(h12, w1, preferred_element_type=jnp.float32) + bias1
        h2, c2 = cell(gates2, c2)

    # fc(out[:, -1, :]) — only the top layer's final hidden state is consumed.
    logits = (jnp.dot(h2.astype(jnp.bfloat16), fcw,
                      preferred_element_type=jnp.float32)
              + b_ref[2:3, :])
    out_ref[...] = logits[:, :NUM_CLASSES]


def lstm_trader_forward(x, params):
    """x: (B, T, input_size), batch-first like the PyTorch module. Returns (B, 2) logits."""
    B, T, D = x.shape
    assert D <= D_PAD
    H = HIDDEN
    Bp = ((B + SUBLANE - 1) // SUBLANE) * SUBLANE

    # Time-major, batch padded to Bp sublanes, features zero-padded to D_PAD, bf16 LHS.
    x_tm = jnp.transpose(x, (1, 0, 2)).astype(jnp.float32)            # (T, B, D)
    x_tm = jnp.pad(x_tm, ((0, 0), (0, Bp - B), (0, D_PAD - D)))
    x2d = x_tm.reshape(T * Bp, D_PAD).astype(jnp.bfloat16)

    vmem = pl.BlockSpec(memory_space=pltpu.MemorySpace.VMEM)
    out = pl.pallas_call(
        functools.partial(_lstm_trader_kernel, T=T, Bp=Bp, H=H),
        out_shape=jax.ShapeDtypeStruct((Bp, NUM_CLASSES), jnp.float32),
        in_specs=[vmem, vmem, vmem],
        out_specs=vmem,
        scratch_shapes=[pltpu.VMEM((T * Bp, 4 * H), jnp.float32)],
    )(x2d, params["w_slab"], params["b_slab"])
    return out[:B]


# ---------------------------------------------------------------------------
# Deterministic parameter init (PyTorch-like uniform ranges), packed:
#   w_slab: (D_PAD + 4H, 4H) bf16   b_slab: (8, 4H) f32
# ---------------------------------------------------------------------------
def init_params(key, input_size=INPUT_SIZE, hidden_size=HIDDEN):
    H = hidden_size
    bound = 1.0 / float(H) ** 0.5

    def uniform(kk, shape):
        return jax.random.uniform(kk, shape, jnp.float32, -bound, bound)

    keys = jax.random.split(key, 10)
    wih0 = uniform(keys[0], (4 * H, input_size))
    whh0 = uniform(keys[1], (4 * H, H))
    b0 = uniform(keys[2], (4 * H,)) + uniform(keys[3], (4 * H,))
    wih1 = uniform(keys[4], (4 * H, H))
    whh1 = uniform(keys[5], (4 * H, H))
    b1 = uniform(keys[6], (4 * H,)) + uniform(keys[7], (4 * H,))
    fcw = uniform(keys[8], (NUM_CLASSES, H))
    fcb = uniform(keys[9], (NUM_CLASSES,))

    wih0_pad = jnp.zeros((D_PAD, 4 * H), jnp.float32).at[:input_size].set(wih0.T)
    fcw_pad = jnp.zeros((H, 4 * H), jnp.float32).at[:, :NUM_CLASSES].set(fcw.T)
    w_slab = jnp.concatenate(
        [wih0_pad, whh0.T, wih1.T, whh1.T, fcw_pad], axis=0
    ).astype(jnp.bfloat16)

    b_slab = jnp.zeros((8, 4 * H), jnp.float32)
    b_slab = b_slab.at[0].set(b0).at[1].set(b1)
    b_slab = b_slab.at[2, :NUM_CLASSES].set(fcb)
    return {"w_slab": w_slab, "b_slab": b_slab}


# ---------------------------------------------------------------------------
# Pure-JAX reference using the SAME bf16 weights / bf16 matmul inputs with f32
# accumulation (so kernel-vs-reference differences are only accumulation order).
# ---------------------------------------------------------------------------
def lstm_trader_reference(x, params):
    H = HIDDEN
    w = params["w_slab"]
    b = params["b_slab"]
    wih0 = w[:INPUT_SIZE, :]
    whh0 = w[D_PAD:D_PAD + H, :]
    wih1 = w[D_PAD + H:D_PAD + 2 * H, :]
    whh1 = w[D_PAD + 2 * H:D_PAD + 3 * H, :]
    fcw = w[D_PAD + 3 * H:D_PAD + 4 * H, :NUM_CLASSES]
    b0, b1 = b[0:1, :], b[1:2, :]
    fcb = b[2:3, :NUM_CLASSES]

    B, T, D = x.shape
    x_tm = jnp.transpose(x, (1, 0, 2)).astype(jnp.float32)   # (T, B, D)

    def run_layer(seq_tm, wih, whh, bias):
        def step(carry, x_t):
            h, c = carry
            gates = (jnp.dot(x_t.astype(jnp.bfloat16), wih,
                             preferred_element_type=jnp.float32)
                     + jnp.dot(h.astype(jnp.bfloat16), whh,
                               preferred_element_type=jnp.float32)
                     + bias)
            i = jax.nn.sigmoid(gates[:, 0 * H:1 * H])
            f = jax.nn.sigmoid(gates[:, 1 * H:2 * H])
            g = jnp.tanh(gates[:, 2 * H:3 * H])
            o = jax.nn.sigmoid(gates[:, 3 * H:4 * H])
            c = f * c + i * g
            h = o * jnp.tanh(c)
            return (h, c), h
        init = (jnp.zeros((B, H), jnp.float32), jnp.zeros((B, H), jnp.float32))
        _, hs = jax.lax.scan(step, init, seq_tm)
        return hs                                             # (T, B, H)

    h1 = run_layer(x_tm, wih0, whh0, b0)
    h2 = run_layer(h1, wih1, whh1, b1)
    return (jnp.dot(h2[-1].astype(jnp.bfloat16), fcw,
                    preferred_element_type=jnp.float32) + fcb)


if __name__ == "__main__":
    # Shapes implied by the module: input_size=9, hidden_size=64, num_layers=2.
    B, T = 2, 8
    key_x, key_p = jax.random.split(jax.random.PRNGKey(0))
    x = jax.random.normal(key_x, (B, T, INPUT_SIZE), dtype=jnp.float32)
    params = init_params(key_p)

    out = jax.block_until_ready(lstm_trader_forward(x, params))
    assert out.shape == (B, NUM_CLASSES), out.shape

    ref = jax.block_until_ready(lstm_trader_reference(x, params))
    assert jnp.allclose(out, ref, atol=2e-3, rtol=2e-3), (out, ref)

    print("KERNEL_OK")
</pallas_src>

<mosaic_0001>
module attributes {stable_mosaic.version = 11 : i64} {
  func.func @_lstm_trader_kernel(%arg0: memref<64x16xbf16, #tpu.memory_space<vmem>>, %arg1: memref<272x256xbf16, #tpu.memory_space<vmem>>, %arg2: memref<8x256xf32, #tpu.memory_space<vmem>>, %arg3: memref<8x2xf32, #tpu.memory_space<vmem>>, %arg4: memref<64x256xf32, #tpu.memory_space<vmem>>) attributes {dimension_semantics = [], scalar_prefetch = 0 : i64, scratch_operands = 1 : i64, tpu.core_type = #tpu.core_type<tc>} {
    %c0 = arith.constant 0 : index
    %c0_0 = arith.constant 0 : index
    %0 = vector.load %arg1[%c0, %c0_0] : memref<272x256xbf16, #tpu.memory_space<vmem>>, vector<16x256xbf16>
    %c16 = arith.constant 16 : index
    %c0_1 = arith.constant 0 : index
    %1 = vector.load %arg1[%c16, %c0_1] : memref<272x256xbf16, #tpu.memory_space<vmem>>, vector<64x256xbf16>
    %c80 = arith.constant 80 : index
    %c0_2 = arith.constant 0 : index
    %2 = vector.load %arg1[%c80, %c0_2] : memref<272x256xbf16, #tpu.memory_space<vmem>>, vector<128x256xbf16>
    %c208 = arith.constant 208 : index
    %c0_3 = arith.constant 0 : index
    %3 = vector.load %arg1[%c208, %c0_3] : memref<272x256xbf16, #tpu.memory_space<vmem>>, vector<64x256xbf16>
    %c0_4 = arith.constant 0 : index
    %c0_5 = arith.constant 0 : index
    %4 = vector.load %arg0[%c0_4, %c0_5] : memref<64x16xbf16, #tpu.memory_space<vmem>>, vector<64x16xbf16>
    %cst = arith.constant dense<0.000000e+00> : vector<64x256xf32>
    %5 = tpu.matmul %4, %0, %cst {dimension_numbers = #tpu.dot_dimension_numbers<[1], [0], [0], [1], [0, 0, 1, 1], [], []>} : vector<64x16xbf16>, vector<16x256xbf16>, vector<64x256xf32> -> vector<64x256xf32>
    %c0_6 = arith.constant 0 : index
    %c0_7 = arith.constant 0 : index
    %6 = vector.load %arg2[%c0_6, %c0_7] : memref<8x256xf32, #tpu.memory_space<vmem>>, vector<1x256xf32>
    %7 = vector.broadcast %6 : vector<1x256xf32> to vector<64x256xf32>
    %8 = arith.addf %5, %7 : vector<64x256xf32>
    %c0_8 = arith.constant 0 : index
    %c0_9 = arith.constant 0 : index
    %9 = vector.load %arg4[%c0_8, %c0_9] : memref<64x256xf32, #tpu.memory_space<vmem>>, vector<64x256xf32>
    tpu.vector_store %arg4[%c0_8, %c0_9], %8 {strides = array<i32>} : memref<64x256xf32, #tpu.memory_space<vmem>>, vector<64x256xf32>,
    %c1 = arith.constant 1 : index
    %c0_10 = arith.constant 0 : index
    %10 = vector.load %arg2[%c1, %c0_10] : memref<8x256xf32, #tpu.memory_space<vmem>>, vector<1x256xf32>
    %11 = vector.shape_cast %10 : vector<1x256xf32> to vector<1x256xf32>
    %12 = vector.broadcast %11 : vector<1x256xf32> to vector<8x256xf32>
    %cst_11 = arith.constant 0.000000e+00 : f32
    %13 = vector.broadcast %cst_11 : f32 to vector<8x64xf32>
    %c0_12 = arith.constant 0 : index
    %c0_13 = arith.constant 0 : index
    %14 = vector.load %arg4[%c0_12, %c0_13] : memref<64x256xf32, #tpu.memory_space<vmem>>, vector<8x256xf32>
    %15 = arith.truncf %13 : vector<8x64xf32> to vector<8x64xbf16>
    %cst_14 = arith.constant dense<0.000000e+00> : vector<8x256xf32>
    %16 = tpu.matmul %15, %1, %cst_14 {dimension_numbers = #tpu.dot_dimension_numbers<[1], [0], [0], [1], [0, 0, 1, 1], [], []>} : vector<8x64xbf16>, vector<64x256xbf16>, vector<8x256xf32> -> vector<8x256xf32>
    %17 = arith.addf %14, %16 : vector<8x256xf32>
    %18 = arith.negf %17 : vector<8x256xf32>
    %19 = math.exp %18 : vector<8x256xf32>
    %cst_15 = arith.constant 1.000000e+00 : f32
    %20 = vector.broadcast %cst_15 : f32 to vector<8x256xf32>
    %21 = arith.addf %20, %19 : vector<8x256xf32>
    %22 = arith.divf %20, %21 : vector<8x256xf32>
    %23 = vector.extract_strided_slice %17 {offsets = [0, 128], sizes = [8, 64], strides = [1, 1]} : vector<8x256xf32> to vector<8x64xf32>
    %24 = math.tanh %23 : vector<8x64xf32>
    %25 = vector.extract_strided_slice %22 {offsets = [0, 0], sizes = [8, 64], strides = [1, 1]} : vector<8x256xf32> to vector<8x64xf32>
    %26 = vector.extract_strided_slice %22 {offsets = [0, 64], sizes = [8, 64], strides = [1, 1]} : vector<8x256xf32> to vector<8x64xf32>
    %27 = vector.extract_strided_slice %22 {offsets = [0, 192], sizes = [8, 64], strides = [1, 1]} : vector<8x256xf32> to vector<8x64xf32>
    %28 = arith.mulf %26, %13 : vector<8x64xf32>
    %29 = arith.mulf %25, %24 : vector<8x64xf32>
    %30 = arith.addf %28, %29 : vector<8x64xf32>
    %31 = math.tanh %30 : vector<8x64xf32>
    %32 = arith.mulf %27, %31 : vector<8x64xf32>
    %33 = tpu.concatenate %32, %13 in 1 : vector<8x64xf32>, vector<8x64xf32> -> vector<8x128xf32>
    %34 = arith.truncf %33 : vector<8x128xf32> to vector<8x128xbf16>
    %cst_16 = arith.constant dense<0.000000e+00> : vector<8x256xf32>
    %35 = tpu.matmul %34, %2, %cst_16 {dimension_numbers = #tpu.dot_dimension_numbers<[1], [0], [0], [1], [0, 0, 1, 1], [], []>} : vector<8x128xbf16>, vector<128x256xbf16>, vector<8x256xf32> -> vector<8x256xf32>
    %36 = arith.addf %35, %12 : vector<8x256xf32>
    %37 = arith.negf %36 : vector<8x256xf32>
    %38 = math.exp %37 : vector<8x256xf32>
    %cst_17 = arith.constant 1.000000e+00 : f32
    %39 = vector.broadcast %cst_17 : f32 to vector<8x256xf32>
    %40 = arith.addf %39, %38 : vector<8x256xf32>
    %41 = arith.divf %39, %40 : vector<8x256xf32>
    %42 = vector.extract_strided_slice %36 {offsets = [0, 128], sizes = [8, 64], strides = [1, 1]} : vector<8x256xf32> to vector<8x64xf32>
    %43 = math.tanh %42 : vector<8x64xf32>
    %44 = vector.extract_strided_slice %41 {offsets = [0, 0], sizes = [8, 64], strides = [1, 1]} : vector<8x256xf32> to vector<8x64xf32>
    %45 = vector.extract_strided_slice %41 {offsets = [0, 64], sizes = [8, 64], strides = [1, 1]} : vector<8x256xf32> to vector<8x64xf32>
    %46 = vector.extract_strided_slice %41 {offsets = [0, 192], sizes = [8, 64], strides = [1, 1]} : vector<8x256xf32> to vector<8x64xf32>
    %47 = arith.mulf %45, %13 : vector<8x64xf32>
    %48 = arith.mulf %44, %43 : vector<8x64xf32>
    %49 = arith.addf %47, %48 : vector<8x64xf32>
    %50 = math.tanh %49 : vector<8x64xf32>
    %51 = arith.mulf %46, %50 : vector<8x64xf32>
    %c8 = arith.constant 8 : index
    %c0_18 = arith.constant 0 : index
    %52 = vector.load %arg4[%c8, %c0_18] : memref<64x256xf32, #tpu.memory_space<vmem>>, vector<8x256xf32>
    %53 = arith.truncf %32 : vector<8x64xf32> to vector<8x64xbf16>
    %cst_19 = arith.constant dense<0.000000e+00> : vector<8x256xf32>
    %54 = tpu.matmul %53, %1, %cst_19 {dimension_numbers = #tpu.dot_dimension_numbers<[1], [0], [0], [1], [0, 0, 1, 1], [], []>} : vector<8x64xbf16>, vector<64x256xbf16>, vector<8x256xf32> -> vector<8x256xf32>
    %55 = arith.addf %52, %54 : vector<8x256xf32>
    %56 = arith.negf %55 : vector<8x256xf32>
    %57 = math.exp %56 : vector<8x256xf32>
    %cst_20 = arith.constant 1.000000e+00 : f32
    %58 = vector.broadcast %cst_20 : f32 to vector<8x256xf32>
    %59 = arith.addf %58, %57 : vector<8x256xf32>
    %60 = arith.divf %58, %59 : vector<8x256xf32>
    %61 = vector.extract_strided_slice %55 {offsets = [0, 128], sizes = [8, 64], strides = [1, 1]} : vector<8x256xf32> to vector<8x64xf32>
    %62 = math.tanh %61 : vector<8x64xf32>
    %63 = vector.extract_strided_slice %60 {offsets = [0, 0], sizes = [8, 64], strides = [1, 1]} : vector<8x256xf32> to vector<8x64xf32>
    %64 = vector.extract_strided_slice %60 {offsets = [0, 64], sizes = [8, 64], strides = [1, 1]} : vector<8x256xf32> to vector<8x64xf32>
    %65 = vector.extract_strided_slice %60 {offsets = [0, 192], sizes = [8, 64], strides = [1, 1]} : vector<8x256xf32> to vector<8x64xf32>
    %66 = arith.mulf %64, %30 : vector<8x64xf32>
    %67 = arith.mulf %63, %62 : vector<8x64xf32>
    %68 = arith.addf %66, %67 : vector<8x64xf32>
    %69 = math.tanh %68 : vector<8x64xf32>
    %70 = arith.mulf %65, %69 : vector<8x64xf32>
    %71 = tpu.concatenate %70, %51 in 1 : vector<8x64xf32>, vector<8x64xf32> -> vector<8x128xf32>
    %72 = arith.truncf %71 : vector<8x128xf32> to vector<8x128xbf16>
    %cst_21 = arith.constant dense<0.000000e+00> : vector<8x256xf32>
    %73 = tpu.matmul %72, %2, %cst_21 {dimension_numbers = #tpu.dot_dimension_numbers<[1], [0], [0], [1], [0, 0, 1, 1], [], []>} : vector<8x128xbf16>, vector<128x256xbf16>, vector<8x256xf32> -> vector<8x256xf32>
    %74 = arith.addf %73, %12 : vector<8x256xf32>
    %75 = arith.negf %74 : vector<8x256xf32>
    %76 = math.exp %75 : vector<8x256xf32>
    %cst_22 = arith.constant 1.000000e+00 : f32
    %77 = vector.broadcast %cst_22 : f32 to vector<8x256xf32>
    %78 = arith.addf %77, %76 : vector<8x256xf32>
    %79 = arith.divf %77, %78 : vector<8x256xf32>
    %80 = vector.extract_strided_slice %74 {offsets = [0, 128], sizes = [8, 64], strides = [1, 1]} : vector<8x256xf32> to vector<8x64xf32>
    %81 = math.tanh %80 : vector<8x64xf32>
    %82 = vector.extract_strided_slice %79 {offsets = [0, 0], sizes = [8, 64], strides = [1, 1]} : vector<8x256xf32> to vector<8x64xf32>
    %83 = vector.extract_strided_slice %79 {offsets = [0, 64], sizes = [8, 64], strides = [1, 1]} : vector<8x256xf32> to vector<8x64xf32>
    %84 = vector.extract_strided_slice %79 {offsets = [0, 192], sizes = [8, 64], strides = [1, 1]} : vector<8x256xf32> to vector<8x64xf32>
    %85 = arith.mulf %83, %49 : vector<8x64xf32>
    %86 = arith.mulf %82, %81 : vector<8x64xf32>
    %87 = arith.addf %85, %86 : vector<8x64xf32>
    %88 = math.tanh %87 : vector<8x64xf32>
    %89 = arith.mulf %84, %88 : vector<8x64xf32>
    %c16_23 = arith.constant 16 : index
    %c0_24 = arith.constant 0 : index
    %90 = vector.load %arg4[%c16_23, %c0_24] : memref<64x256xf32, #tpu.memory_space<vmem>>, vector<8x256xf32>
    %91 = arith.truncf %70 : vector<8x64xf32> to vector<8x64xbf16>
    %cst_25 = arith.constant dense<0.000000e+00> : vector<8x256xf32>
    %92 = tpu.matmul %91, %1, %cst_25 {dimension_numbers = #tpu.dot_dimension_numbers<[1], [0], [0], [1], [0, 0, 1, 1], [], []>} : vector<8x64xbf16>, vector<64x256xbf16>, vector<8x256xf32> -> vector<8x256xf32>
    %93 = arith.addf %90, %92 : vector<8x256xf32>
    %94 = arith.negf %93 : vector<8x256xf32>
    %95 = math.exp %94 : vector<8x256xf32>
    %cst_26 = arith.constant 1.000000e+00 : f32
    %96 = vector.broadcast %cst_26 : f32 to vector<8x256xf32>
    %97 = arith.addf %96, %95 : vector<8x256xf32>
    %98 = arith.divf %96, %97 : vector<8x256xf32>
    %99 = vector.extract_strided_slice %93 {offsets = [0, 128], sizes = [8, 64], strides = [1, 1]} : vector<8x256xf32> to vector<8x64xf32>
    %100 = math.tanh %99 : vector<8x64xf32>
    %101 = vector.extract_strided_slice %98 {offsets = [0, 0], sizes = [8, 64], strides = [1, 1]} : vector<8x256xf32> to vector<8x64xf32>
    %102 = vector.extract_strided_slice %98 {offsets = [0, 64], sizes = [8, 64], strides = [1, 1]} : vector<8x256xf32> to vector<8x64xf32>
    %103 = vector.extract_strided_slice %98 {offsets = [0, 192], sizes = [8, 64], strides = [1, 1]} : vector<8x256xf32> to vector<8x64xf32>
    %104 = arith.mulf %102, %68 : vector<8x64xf32>
    %105 = arith.mulf %101, %100 : vector<8x64xf32>
    %106 = arith.addf %104, %105 : vector<8x64xf32>
    %107 = math.tanh %106 : vector<8x64xf32>
    %108 = arith.mulf %103, %107 : vector<8x64xf32>
    %109 = tpu.concatenate %108, %89 in 1 : vector<8x64xf32>, vector<8x64xf32> -> vector<8x128xf32>
    %110 = arith.truncf %109 : vector<8x128xf32> to vector<8x128xbf16>
    %cst_27 = arith.constant dense<0.000000e+00> : vector<8x256xf32>
    %111 = tpu.matmul %110, %2, %cst_27 {dimension_numbers = #tpu.dot_dimension_numbers<[1], [0], [0], [1], [0, 0, 1, 1], [], []>} : vector<8x128xbf16>, vector<128x256xbf16>, vector<8x256xf32> -> vector<8x256xf32>
    %112 = arith.addf %111, %12 : vector<8x256xf32>
    %113 = arith.negf %112 : vector<8x256xf32>
    %114 = math.exp %113 : vector<8x256xf32>
    %cst_28 = arith.constant 1.000000e+00 : f32
    %115 = vector.broadcast %cst_28 : f32 to vector<8x256xf32>
    %116 = arith.addf %115, %114 : vector<8x256xf32>
    %117 = arith.divf %115, %116 : vector<8x256xf32>
    %118 = vector.extract_strided_slice %112 {offsets = [0, 128], sizes = [8, 64], strides = [1, 1]} : vector<8x256xf32> to vector<8x64xf32>
    %119 = math.tanh %118 : vector<8x64xf32>
    %120 = vector.extract_strided_slice %117 {offsets = [0, 0], sizes = [8, 64], strides = [1, 1]} : vector<8x256xf32> to vector<8x64xf32>
    %121 = vector.extract_strided_slice %117 {offsets = [0, 64], sizes = [8, 64], strides = [1, 1]} : vector<8x256xf32> to vector<8x64xf32>
    %122 = vector.extract_strided_slice %117 {offsets = [0, 192], sizes = [8, 64], strides = [1, 1]} : vector<8x256xf32> to vector<8x64xf32>
    %123 = arith.mulf %121, %87 : vector<8x64xf32>
    %124 = arith.mulf %120, %119 : vector<8x64xf32>
    %125 = arith.addf %123, %124 : vector<8x64xf32>
    %126 = math.tanh %125 : vector<8x64xf32>
    %127 = arith.mulf %122, %126 : vector<8x64xf32>
    %c24 = arith.constant 24 : index
    %c0_29 = arith.constant 0 : index
    %128 = vector.load %arg4[%c24, %c0_29] : memref<64x256xf32, #tpu.memory_space<vmem>>, vector<8x256xf32>
    %129 = arith.truncf %108 : vector<8x64xf32> to vector<8x64xbf16>
    %cst_30 = arith.constant dense<0.000000e+00> : vector<8x256xf32>
    %130 = tpu.matmul %129, %1, %cst_30 {dimension_numbers = #tpu.dot_dimension_numbers<[1], [0], [0], [1], [0, 0, 1, 1], [], []>} : vector<8x64xbf16>, vector<64x256xbf16>, vector<8x256xf32> -> vector<8x256xf32>
    %131 = arith.addf %128, %130 : vector<8x256xf32>
    %132 = arith.negf %131 : vector<8x256xf32>
    %133 = math.exp %132 : vector<8x256xf32>
    %cst_31 = arith.constant 1.000000e+00 : f32
    %134 = vector.broadcast %cst_31 : f32 to vector<8x256xf32>
    %135 = arith.addf %134, %133 : vector<8x256xf32>
    %136 = arith.divf %134, %135 : vector<8x256xf32>
    %137 = vector.extract_strided_slice %131 {offsets = [0, 128], sizes = [8, 64], strides = [1, 1]} : vector<8x256xf32> to vector<8x64xf32>
    %138 = math.tanh %137 : vector<8x64xf32>
    %139 = vector.extract_strided_slice %136 {offsets = [0, 0], sizes = [8, 64], strides = [1, 1]} : vector<8x256xf32> to vector<8x64xf32>
    %140 = vector.extract_strided_slice %136 {offsets = [0, 64], sizes = [8, 64], strides = [1, 1]} : vector<8x256xf32> to vector<8x64xf32>
    %141 = vector.extract_strided_slice %136 {offsets = [0, 192], sizes = [8, 64], strides = [1, 1]} : vector<8x256xf32> to vector<8x64xf32>
    %142 = arith.mulf %140, %106 : vector<8x64xf32>
    %143 = arith.mulf %139, %138 : vector<8x64xf32>
    %144 = arith.addf %142, %143 : vector<8x64xf32>
    %145 = math.tanh %144 : vector<8x64xf32>
    %146 = arith.mulf %141, %145 : vector<8x64xf32>
    %147 = tpu.concatenate %146, %127 in 1 : vector<8x64xf32>, vector<8x64xf32> -> vector<8x128xf32>
    %148 = arith.truncf %147 : vector<8x128xf32> to vector<8x128xbf16>
    %cst_32 = arith.constant dense<0.000000e+00> : vector<8x256xf32>
    %149 = tpu.matmul %148, %2, %cst_32 {dimension_numbers = #tpu.dot_dimension_numbers<[1], [0], [0], [1], [0, 0, 1, 1], [], []>} : vector<8x128xbf16>, vector<128x256xbf16>, vector<8x256xf32> -> vector<8x256xf32>
    %150 = arith.addf %149, %12 : vector<8x256xf32>
    %151 = arith.negf %150 : vector<8x256xf32>
    %152 = math.exp %151 : vector<8x256xf32>
    %cst_33 = arith.constant 1.000000e+00 : f32
    %153 = vector.broadcast %cst_33 : f32 to vector<8x256xf32>
    %154 = arith.addf %153, %152 : vector<8x256xf32>
    %155 = arith.divf %153, %154 : vector<8x256xf32>
    %156 = vector.extract_strided_slice %150 {offsets = [0, 128], sizes = [8, 64], strides = [1, 1]} : vector<8x256xf32> to vector<8x64xf32>
    %157 = math.tanh %156 : vector<8x64xf32>
    %158 = vector.extract_strided_slice %155 {offsets = [0, 0], sizes = [8, 64], strides = [1, 1]} : vector<8x256xf32> to vector<8x64xf32>
    %159 = vector.extract_strided_slice %155 {offsets = [0, 64], sizes = [8, 64], strides = [1, 1]} : vector<8x256xf32> to vector<8x64xf32>
    %160 = vector.extract_strided_slice %155 {offsets = [0, 192], sizes = [8, 64], strides = [1, 1]} : vector<8x256xf32> to vector<8x64xf32>
    %161 = arith.mulf %159, %125 : vector<8x64xf32>
    %162 = arith.mulf %158, %157 : vector<8x64xf32>
    %163 = arith.addf %161, %162 : vector<8x64xf32>
    %164 = math.tanh %163 : vector<8x64xf32>
    %165 = arith.mulf %160, %164 : vector<8x64xf32>
    %c32 = arith.constant 32 : index
    %c0_34 = arith.constant 0 : index
    %166 = vector.load %arg4[%c32, %c0_34] : memref<64x256xf32, #tpu.memory_space<vmem>>, vector<8x256xf32>
    %167 = arith.truncf %146 : vector<8x64xf32> to vector<8x64xbf16>
    %cst_35 = arith.constant dense<0.000000e+00> : vector<8x256xf32>
    %168 = tpu.matmul %167, %1, %cst_35 {dimension_numbers = #tpu.dot_dimension_numbers<[1], [0], [0], [1], [0, 0, 1, 1], [], []>} : vector<8x64xbf16>, vector<64x256xbf16>, vector<8x256xf32> -> vector<8x256xf32>
    %169 = arith.addf %166, %168 : vector<8x256xf32>
    %170 = arith.negf %169 : vector<8x256xf32>
    %171 = math.exp %170 : vector<8x256xf32>
    %cst_36 = arith.constant 1.000000e+00 : f32
    %172 = vector.broadcast %cst_36 : f32 to vector<8x256xf32>
    %173 = arith.addf %172, %171 : vector<8x256xf32>
    %174 = arith.divf %172, %173 : vector<8x256xf32>
    %175 = vector.extract_strided_slice %169 {offsets = [0, 128], sizes = [8, 64], strides = [1, 1]} : vector<8x256xf32> to vector<8x64xf32>
    %176 = math.tanh %175 : vector<8x64xf32>
    %177 = vector.extract_strided_slice %174 {offsets = [0, 0], sizes = [8, 64], strides = [1, 1]} : vector<8x256xf32> to vector<8x64xf32>
    %178 = vector.extract_strided_slice %174 {offsets = [0, 64], sizes = [8, 64], strides = [1, 1]} : vector<8x256xf32> to vector<8x64xf32>
    %179 = vector.extract_strided_slice %174 {offsets = [0, 192], sizes = [8, 64], strides = [1, 1]} : vector<8x256xf32> to vector<8x64xf32>
    %180 = arith.mulf %178, %144 : vector<8x64xf32>
    %181 = arith.mulf %177, %176 : vector<8x64xf32>
    %182 = arith.addf %180, %181 : vector<8x64xf32>
    %183 = math.tanh %182 : vector<8x64xf32>
    %184 = arith.mulf %179, %183 : vector<8x64xf32>
    %185 = tpu.concatenate %184, %165 in 1 : vector<8x64xf32>, vector<8x64xf32> -> vector<8x128xf32>
    %186 = arith.truncf %185 : vector<8x128xf32> to vector<8x128xbf16>
    %cst_37 = arith.constant dense<0.000000e+00> : vector<8x256xf32>
    %187 = tpu.matmul %186, %2, %cst_37 {dimension_numbers = #tpu.dot_dimension_numbers<[1], [0], [0], [1], [0, 0, 1, 1], [], []>} : vector<8x128xbf16>, vector<128x256xbf16>, vector<8x256xf32> -> vector<8x256xf32>
    %188 = arith.addf %187, %12 : vector<8x256xf32>
    %189 = arith.negf %188 : vector<8x256xf32>
    %190 = math.exp %189 : vector<8x256xf32>
    %cst_38 = arith.constant 1.000000e+00 : f32
    %191 = vector.broadcast %cst_38 : f32 to vector<8x256xf32>
    %192 = arith.addf %191, %190 : vector<8x256xf32>
    %193 = arith.divf %191, %192 : vector<8x256xf32>
    %194 = vector.extract_strided_slice %188 {offsets = [0, 128], sizes = [8, 64], strides = [1, 1]} : vector<8x256xf32> to vector<8x64xf32>
    %195 = math.tanh %194 : vector<8x64xf32>
    %196 = vector.extract_strided_slice %193 {offsets = [0, 0], sizes = [8, 64], strides = [1, 1]} : vector<8x256xf32> to vector<8x64xf32>
    %197 = vector.extract_strided_slice %193 {offsets = [0, 64], sizes = [8, 64], strides = [1, 1]} : vector<8x256xf32> to vector<8x64xf32>
    %198 = vector.extract_strided_slice %193 {offsets = [0, 192], sizes = [8, 64], strides = [1, 1]} : vector<8x256xf32> to vector<8x64xf32>
    %199 = arith.mulf %197, %163 : vector<8x64xf32>
    %200 = arith.mulf %196, %195 : vector<8x64xf32>
    %201 = arith.addf %199, %200 : vector<8x64xf32>
    %202 = math.tanh %201 : vector<8x64xf32>
    %203 = arith.mulf %198, %202 : vector<8x64xf32>
    %c40 = arith.constant 40 : index
    %c0_39 = arith.constant 0 : index
    %204 = vector.load %arg4[%c40, %c0_39] : memref<64x256xf32, #tpu.memory_space<vmem>>, vector<8x256xf32>
    %205 = arith.truncf %184 : vector<8x64xf32> to vector<8x64xbf16>
    %cst_40 = arith.constant dense<0.000000e+00> : vector<8x256xf32>
    %206 = tpu.matmul %205, %1, %cst_40 {dimension_numbers = #tpu.dot_dimension_numbers<[1], [0], [0], [1], [0, 0, 1, 1], [], []>} : vector<8x64xbf16>, vector<64x256xbf16>, vector<8x256xf32> -> vector<8x256xf32>
    %207 = arith.addf %204, %206 : vector<8x256xf32>
    %208 = arith.negf %207 : vector<8x256xf32>
    %209 = math.exp %208 : vector<8x256xf32>
    %cst_41 = arith.constant 1.000000e+00 : f32
    %210 = vector.broadcast %cst_41 : f32 to vector<8x256xf32>
    %211 = arith.addf %210, %209 : vector<8x256xf32>
    %212 = arith.divf %210, %211 : vector<8x256xf32>
    %213 = vector.extract_strided_slice %207 {offsets = [0, 128], sizes = [8, 64], strides = [1, 1]} : vector<8x256xf32> to vector<8x64xf32>
    %214 = math.tanh %213 : vector<8x64xf32>
    %215 = vector.extract_strided_slice %212 {offsets = [0, 0], sizes = [8, 64], strides = [1, 1]} : vector<8x256xf32> to vector<8x64xf32>
    %216 = vector.extract_strided_slice %212 {offsets = [0, 64], sizes = [8, 64], strides = [1, 1]} : vector<8x256xf32> to vector<8x64xf32>
    %217 = vector.extract_strided_slice %212 {offsets = [0, 192], sizes = [8, 64], strides = [1, 1]} : vector<8x256xf32> to vector<8x64xf32>
    %218 = arith.mulf %216, %182 : vector<8x64xf32>
    %219 = arith.mulf %215, %214 : vector<8x64xf32>
    %220 = arith.addf %218, %219 : vector<8x64xf32>
    %221 = math.tanh %220 : vector<8x64xf32>
    %222 = arith.mulf %217, %221 : vector<8x64xf32>
    %223 = tpu.concatenate %222, %203 in 1 : vector<8x64xf32>, vector<8x64xf32> -> vector<8x128xf32>
    %224 = arith.truncf %223 : vector<8x128xf32> to vector<8x128xbf16>
    %cst_42 = arith.constant dense<0.000000e+00> : vector<8x256xf32>
    %225 = tpu.matmul %224, %2, %cst_42 {dimension_numbers = #tpu.dot_dimension_numbers<[1], [0], [0], [1], [0, 0, 1, 1], [], []>} : vector<8x128xbf16>, vector<128x256xbf16>, vector<8x256xf32> -> vector<8x256xf32>
    %226 = arith.addf %225, %12 : vector<8x256xf32>
    %227 = arith.negf %226 : vector<8x256xf32>
    %228 = math.exp %227 : vector<8x256xf32>
    %cst_43 = arith.constant 1.000000e+00 : f32
    %229 = vector.broadcast %cst_43 : f32 to vector<8x256xf32>
    %230 = arith.addf %229, %228 : vector<8x256xf32>
    %231 = arith.divf %229, %230 : vector<8x256xf32>
    %232 = vector.extract_strided_slice %226 {offsets = [0, 128], sizes = [8, 64], strides = [1, 1]} : vector<8x256xf32> to vector<8x64xf32>
    %233 = math.tanh %232 : vector<8x64xf32>
    %234 = vector.extract_strided_slice %231 {offsets = [0, 0], sizes = [8, 64], strides = [1, 1]} : vector<8x256xf32> to vector<8x64xf32>
    %235 = vector.extract_strided_slice %231 {offsets = [0, 64], sizes = [8, 64], strides = [1, 1]} : vector<8x256xf32> to vector<8x64xf32>
    %236 = vector.extract_strided_slice %231 {offsets = [0, 192], sizes = [8, 64], strides = [1, 1]} : vector<8x256xf32> to vector<8x64xf32>
    %237 = arith.mulf %235, %201 : vector<8x64xf32>
    %238 = arith.mulf %234, %233 : vector<8x64xf32>
    %239 = arith.addf %237, %238 : vector<8x64xf32>
    %240 = math.tanh %239 : vector<8x64xf32>
    %241 = arith.mulf %236, %240 : vector<8x64xf32>
    %c48 = arith.constant 48 : index
    %c0_44 = arith.constant 0 : index
    %242 = vector.load %arg4[%c48, %c0_44] : memref<64x256xf32, #tpu.memory_space<vmem>>, vector<8x256xf32>
    %243 = arith.truncf %222 : vector<8x64xf32> to vector<8x64xbf16>
    %cst_45 = arith.constant dense<0.000000e+00> : vector<8x256xf32>
    %244 = tpu.matmul %243, %1, %cst_45 {dimension_numbers = #tpu.dot_dimension_numbers<[1], [0], [0], [1], [0, 0, 1, 1], [], []>} : vector<8x64xbf16>, vector<64x256xbf16>, vector<8x256xf32> -> vector<8x256xf32>
    %245 = arith.addf %242, %244 : vector<8x256xf32>
    %246 = arith.negf %245 : vector<8x256xf32>
    %247 = math.exp %246 : vector<8x256xf32>
    %cst_46 = arith.constant 1.000000e+00 : f32
    %248 = vector.broadcast %cst_46 : f32 to vector<8x256xf32>
    %249 = arith.addf %248, %247 : vector<8x256xf32>
    %250 = arith.divf %248, %249 : vector<8x256xf32>
    %251 = vector.extract_strided_slice %245 {offsets = [0, 128], sizes = [8, 64], strides = [1, 1]} : vector<8x256xf32> to vector<8x64xf32>
    %252 = math.tanh %251 : vector<8x64xf32>
    %253 = vector.extract_strided_slice %250 {offsets = [0, 0], sizes = [8, 64], strides = [1, 1]} : vector<8x256xf32> to vector<8x64xf32>
    %254 = vector.extract_strided_slice %250 {offsets = [0, 64], sizes = [8, 64], strides = [1, 1]} : vector<8x256xf32> to vector<8x64xf32>
    %255 = vector.extract_strided_slice %250 {offsets = [0, 192], sizes = [8, 64], strides = [1, 1]} : vector<8x256xf32> to vector<8x64xf32>
    %256 = arith.mulf %254, %220 : vector<8x64xf32>
    %257 = arith.mulf %253, %252 : vector<8x64xf32>
    %258 = arith.addf %256, %257 : vector<8x64xf32>
    %259 = math.tanh %258 : vector<8x64xf32>
    %260 = arith.mulf %255, %259 : vector<8x64xf32>
    %261 = tpu.concatenate %260, %241 in 1 : vector<8x64xf32>, vector<8x64xf32> -> vector<8x128xf32>
    %262 = arith.truncf %261 : vector<8x128xf32> to vector<8x128xbf16>
    %cst_47 = arith.constant dense<0.000000e+00> : vector<8x256xf32>
    %263 = tpu.matmul %262, %2, %cst_47 {dimension_numbers = #tpu.dot_dimension_numbers<[1], [0], [0], [1], [0, 0, 1, 1], [], []>} : vector<8x128xbf16>, vector<128x256xbf16>, vector<8x256xf32> -> vector<8x256xf32>
    %264 = arith.addf %263, %12 : vector<8x256xf32>
    %265 = arith.negf %264 : vector<8x256xf32>
    %266 = math.exp %265 : vector<8x256xf32>
    %cst_48 = arith.constant 1.000000e+00 : f32
    %267 = vector.broadcast %cst_48 : f32 to vector<8x256xf32>
    %268 = arith.addf %267, %266 : vector<8x256xf32>
    %269 = arith.divf %267, %268 : vector<8x256xf32>
    %270 = vector.extract_strided_slice %264 {offsets = [0, 128], sizes = [8, 64], strides = [1, 1]} : vector<8x256xf32> to vector<8x64xf32>
    %271 = math.tanh %270 : vector<8x64xf32>
    %272 = vector.extract_strided_slice %269 {offsets = [0, 0], sizes = [8, 64], strides = [1, 1]} : vector<8x256xf32> to vector<8x64xf32>
    %273 = vector.extract_strided_slice %269 {offsets = [0, 64], sizes = [8, 64], strides = [1, 1]} : vector<8x256xf32> to vector<8x64xf32>
    %274 = vector.extract_strided_slice %269 {offsets = [0, 192], sizes = [8, 64], strides = [1, 1]} : vector<8x256xf32> to vector<8x64xf32>
    %275 = arith.mulf %273, %239 : vector<8x64xf32>
    %276 = arith.mulf %272, %271 : vector<8x64xf32>
    %277 = arith.addf %275, %276 : vector<8x64xf32>
    %278 = math.tanh %277 : vector<8x64xf32>
    %279 = arith.mulf %274, %278 : vector<8x64xf32>
    %c56 = arith.constant 56 : index
    %c0_49 = arith.constant 0 : index
    %280 = vector.load %arg4[%c56, %c0_49] : memref<64x256xf32, #tpu.memory_space<vmem>>, vector<8x256xf32>
    %281 = arith.truncf %260 : vector<8x64xf32> to vector<8x64xbf16>
    %cst_50 = arith.constant dense<0.000000e+00> : vector<8x256xf32>
    %282 = tpu.matmul %281, %1, %cst_50 {dimension_numbers = #tpu.dot_dimension_numbers<[1], [0], [0], [1], [0, 0, 1, 1], [], []>} : vector<8x64xbf16>, vector<64x256xbf16>, vector<8x256xf32> -> vector<8x256xf32>
    %283 = arith.addf %280, %282 : vector<8x256xf32>
    %284 = arith.negf %283 : vector<8x256xf32>
    %285 = math.exp %284 : vector<8x256xf32>
    %cst_51 = arith.constant 1.000000e+00 : f32
    %286 = vector.broadcast %cst_51 : f32 to vector<8x256xf32>
    %287 = arith.addf %286, %285 : vector<8x256xf32>
    %288 = arith.divf %286, %287 : vector<8x256xf32>
    %289 = vector.extract_strided_slice %283 {offsets = [0, 128], sizes = [8, 64], strides = [1, 1]} : vector<8x256xf32> to vector<8x64xf32>
    %290 = math.tanh %289 : vector<8x64xf32>
    %291 = vector.extract_strided_slice %288 {offsets = [0, 0], sizes = [8, 64], strides = [1, 1]} : vector<8x256xf32> to vector<8x64xf32>
    %292 = vector.extract_strided_slice %288 {offsets = [0, 64], sizes = [8, 64], strides = [1, 1]} : vector<8x256xf32> to vector<8x64xf32>
    %293 = vector.extract_strided_slice %288 {offsets = [0, 192], sizes = [8, 64], strides = [1, 1]} : vector<8x256xf32> to vector<8x64xf32>
    %294 = arith.mulf %292, %258 : vector<8x64xf32>
    %295 = arith.mulf %291, %290 : vector<8x64xf32>
    %296 = arith.addf %294, %295 : vector<8x64xf32>
    %297 = math.tanh %296 : vector<8x64xf32>
    %298 = arith.mulf %293, %297 : vector<8x64xf32>
    %299 = tpu.concatenate %298, %279 in 1 : vector<8x64xf32>, vector<8x64xf32> -> vector<8x128xf32>
    %300 = arith.truncf %299 : vector<8x128xf32> to vector<8x128xbf16>
    %cst_52 = arith.constant dense<0.000000e+00> : vector<8x256xf32>
    %301 = tpu.matmul %300, %2, %cst_52 {dimension_numbers = #tpu.dot_dimension_numbers<[1], [0], [0], [1], [0, 0, 1, 1], [], []>} : vector<8x128xbf16>, vector<128x256xbf16>, vector<8x256xf32> -> vector<8x256xf32>
    %302 = arith.addf %301, %12 : vector<8x256xf32>
    %303 = arith.negf %302 : vector<8x256xf32>
    %304 = math.exp %303 : vector<8x256xf32>
    %cst_53 = arith.constant 1.000000e+00 : f32
    %305 = vector.broadcast %cst_53 : f32 to vector<8x256xf32>
    %306 = arith.addf %305, %304 : vector<8x256xf32>
    %307 = arith.divf %305, %306 : vector<8x256xf32>
    %308 = vector.extract_strided_slice %302 {offsets = [0, 128], sizes = [8, 64], strides = [1, 1]} : vector<8x256xf32> to vector<8x64xf32>
    %309 = math.tanh %308 : vector<8x64xf32>
    %310 = vector.extract_strided_slice %307 {offsets = [0, 0], sizes = [8, 64], strides = [1, 1]} : vector<8x256xf32> to vector<8x64xf32>
    %311 = vector.extract_strided_slice %307 {offsets = [0, 64], sizes = [8, 64], strides = [1, 1]} : vector<8x256xf32> to vector<8x64xf32>
    %312 = vector.extract_strided_slice %307 {offsets = [0, 192], sizes = [8, 64], strides = [1, 1]} : vector<8x256xf32> to vector<8x64xf32>
    %313 = arith.mulf %311, %277 : vector<8x64xf32>
    %314 = arith.mulf %310, %309 : vector<8x64xf32>
    %315 = arith.addf %313, %314 : vector<8x64xf32>
    %316 = math.tanh %315 : vector<8x64xf32>
    %317 = arith.mulf %312, %316 : vector<8x64xf32>
    %318 = arith.truncf %317 : vector<8x64xf32> to vector<8x64xbf16>
    %cst_54 = arith.constant dense<0.000000e+00> : vector<8x256xf32>
    %319 = tpu.matmul %318, %3, %cst_54 {dimension_numbers = #tpu.dot_dimension_numbers<[1], [0], [0], [1], [0, 0, 1, 1], [], []>} : vector<8x64xbf16>, vector<64x256xbf16>, vector<8x256xf32> -> vector<8x256xf32>
    %c2 = arith.constant 2 : index
    %c0_55 = arith.constant 0 : index
    %320 = vector.load %arg2[%c2, %c0_55] : memref<8x256xf32, #tpu.memory_space<vmem>>, vector<1x256xf32>
    %321 = vector.broadcast %320 : vector<1x256xf32> to vector<8x256xf32>
    %322 = arith.addf %319, %321 : vector<8x256xf32>
    %323 = vector.extract_strided_slice %322 {offsets = [0, 0], sizes = [8, 2], strides = [1, 1]} : vector<8x256xf32> to vector<8x2xf32>
    %c0_56 = arith.constant 0 : index
    %c0_57 = arith.constant 0 : index
    %324 = vector.load %arg3[%c0_56, %c0_57] : memref<8x2xf32, #tpu.memory_space<vmem>>, vector<8x2xf32>
    tpu.vector_store %arg3[%c0_56, %c0_57], %323 {strides = array<i32>} : memref<8x2xf32, #tpu.memory_space<vmem>>, vector<8x2xf32>,
    return
  }
}

</mosaic_0001>

<llo_original>
// kernel: tpu_custom_call.1
$region0: #{tpu_custom_call.1}
  #allocation0 [shape = 'u32[]', space=smem, size = 0x4, offset = 0x4, fixed_abs, tag = 'smem constant byte address 0x4 - core index']
  #allocation1 [shape = 'u32[72,128]{1,0:T(1,128)}', space=vmem, size = 0x9000, scoped, tag = 'internal scratch']
  #allocation2 [shape = 'f32[64,256]{1,0:T(8,128)}', space=vmem, size = 0x10000, scoped, tag = 'scratch operand']
  %s0 = inlined_call_operand.vmem [shape: bf16[64,16], index: 0, kind: input, shape index: {}]
  %s1 = inlined_call_operand.hbm [shape: bf16[272,256], index: 1, kind: input, shape index: {}]
  %s2 = inlined_call_operand.vmem [shape: f32[8,256], index: 2, kind: input, shape index: {}]
  %s3 = inlined_call_operand.vmem [shape: f32[8,2], index: 3, kind: output, shape index: {}]
  %s4 = sld [smem:[#allocation0]]
  $region26: #{tpu_custom_call.1} parent=0
    _
  %s6 = ssub.s32 1, %s4
  %s7 = scalar_select 0, %s6, %s4
  $region1: #{tpu_custom_call.1} parent=0
    #allocation3 [shape = 'u8[139264]{0}', space=vmem, size = 0x22000, scoped, tag = 'input window, operand 1, single buffered']
    #allocation4 [shape = 's32[1]{0}', space=sflag, size = 0x4, scoped, tag = 'scoped memory for tpu_custom_call.1']
    %8 = vsyncpa [#allocation4], 0
    // Predicated region
    $region2: #{tpu_custom_call.1} parent=1 // pred_check
      _
    $region3: #{tpu_custom_call.1} parent=1 // pred_check_branch
      %10 = sbr.rel (0) target = $region5
    $region4: #{tpu_custom_call.1} parent=1 // pred_region
      _
    $region5: #{tpu_custom_call.1} parent=1 // pred_fallthru
      _
    // Predicated region
    $region6: #{tpu_custom_call.1} parent=1 // pred_check
      _
    $region7: #{tpu_custom_call.1} parent=1 // pred_check_branch
      %12 = sbr.rel (0) target = $region9
    $region8: #{tpu_custom_call.1} parent=1 // pred_region
      %14 = vsyncadd [#allocation4], 0
      %s15 = sshll.u32 %s1, 4
      %s16 = int_to_ptr.hbm [resolvable:$true] %s15
      %s17 = sshll.u32 [#allocation3], 4
      %s18 = int_to_ptr.vmem [resolvable:$true] %s17
      %23 = dma.hbm_to_vmem [thread:$0]  %s16, 4352, %s18, [#allocation4], 128, 128, 8
    $region9: #{tpu_custom_call.1} parent=1 // pred_fallthru
      _
    // Predicated region
    $region10: #{tpu_custom_call.1} parent=1 // pred_check
      _
    $region11: #{tpu_custom_call.1} parent=1 // pred_check_branch
      %25 = sbr.rel (0) target = $region13
    $region12: #{tpu_custom_call.1} parent=1 // pred_region
      _
    $region13: #{tpu_custom_call.1} parent=1 // pred_fallthru
      _
    // Predicated region
    $region14: #{tpu_custom_call.1} parent=1 // pred_check
      _
    $region15: #{tpu_custom_call.1} parent=1 // pred_check_branch
      %27 = sbr.rel (0) target = $region17
    $region16: #{tpu_custom_call.1} parent=1 // pred_region
      %29 = dma.done [#allocation4], 4352
    $region17: #{tpu_custom_call.1} parent=1 // pred_fallthru
      _
    %v31 = vld [vmem:[#allocation3] sm:$0xff]
    %v32 = vld [vmem:[#allocation3 + $0x8] sm:$0xff]
    %v33 = vld [vmem:[#allocation3 + $0x10] sm:$0xff]
    %v34 = vld [vmem:[#allocation3 + $0x18] sm:$0xff]
    %v35 = vld [vmem:[#allocation3 + $0x20] sm:$0xff]
    %v36 = vld [vmem:[#allocation3 + $0x28] sm:$0xff]
    %v37 = vld [vmem:[#allocation3 + $0x30] sm:$0xff]
    %v38 = vld [vmem:[#allocation3 + $0x38] sm:$0xff]
    %v39 = vld [vmem:[#allocation3 + $0x40] sm:$0xff]
    %v40 = vld [vmem:[#allocation3 + $0x48] sm:$0xff]
    %v41 = vld [vmem:[#allocation3 + $0x50] sm:$0xff]
    %v42 = vld [vmem:[#allocation3 + $0x58] sm:$0xff]
    %v43 = vld [vmem:[#allocation3 + $0x60] sm:$0xff]
    %v44 = vld [vmem:[#allocation3 + $0x68] sm:$0xff]
    %v45 = vld [vmem:[#allocation3 + $0x70] sm:$0xff]
    %v46 = vld [vmem:[#allocation3 + $0x78] sm:$0xff]
    %v47 = vld [vmem:[#allocation3 + $0x80] sm:$0xff]
    %v48 = vld [vmem:[#allocation3 + $0x88] sm:$0xff]
    %v49 = vld [vmem:[#allocation3 + $0x90] sm:$0xff]
    %v50 = vld [vmem:[#allocation3 + $0x98] sm:$0xff]
    %v51 = vld [vmem:[#allocation3 + $0xa0] sm:$0xff]
    %v52 = vld [vmem:[#allocation3 + $0xa8] sm:$0xff]
    %v53 = vld [vmem:[#allocation3 + $0xb0] sm:$0xff]
    %v54 = vld [vmem:[#allocation3 + $0xb8] sm:$0xff]
    %v55 = vld [vmem:[#allocation3 + $0xc0] sm:$0xff]
    %v56 = vld [vmem:[#allocation3 + $0xc8] sm:$0xff]
    %v57 = vld [vmem:[#allocation3 + $0xd0] sm:$0xff]
    %v58 = vld [vmem:[#allocation3 + $0xd8] sm:$0xff]
    %v59 = vld [vmem:[#allocation3 + $0xe0] sm:$0xff]
    %v60 = vld [vmem:[#allocation3 + $0xe8] sm:$0xff]
    %v61 = vld [vmem:[#allocation3 + $0xf0] sm:$0xff]
    %v62 = vld [vmem:[#allocation3 + $0xf8] sm:$0xff]
    %v63 = vld [vmem:[#allocation3 + $0x100] sm:$0xff]
    %v64 = vld [vmem:[#allocation3 + $0x108] sm:$0xff]
    %v65 = vld [vmem:[%s0] sm:$0xf]
    %v66 = vld [vmem:[%s0 + $0x4] sm:$0xf]
    %v67 = vld [vmem:[%s0 + $0x8] sm:$0xf]
    %v68 = vld [vmem:[%s0 + $0xc] sm:$0xf]
    %v69 = vld [vmem:[%s0 + $0x10] sm:$0xf]
    %v70 = vld [vmem:[%s0 + $0x14] sm:$0xf]
    %v71 = vld [vmem:[%s0 + $0x18] sm:$0xf]
    %v72 = vld [vmem:[%s0 + $0x1c] sm:$0xf]
    %v73 = vld [vmem:[%s2] ss:$8 sm:$0x3]
    %v75 = vperm.slane %v73, 0
    %v76 = vperm.slane %v73, 1
    %v87 = vunpack.c.l.b16 %v65
    %v88 = vunpack.c.l.b16 %v66
    %v89 = vunpack.c.l.b16 %v67
    %v90 = vunpack.c.l.b16 %v68
    %v91 = vunpack.c.l.b16 %v69
    %v92 = vunpack.c.l.b16 %v70
    %v93 = vunpack.c.l.b16 %v71
    %v94 = vunpack.c.l.b16 %v72
    %v95 = vpack.c.b16 %v88, %v87
    %v96 = vpack.c.b16 %v90, %v89
    %v97 = vpack.c.b16 %v92, %v91
    %v98 = vpack.c.b16 %v94, %v93
    %v101 = vunpack.c.l.b16 %v31
    %v102 = vunpack.c.h.b16 %v31
    %v103 = vunpack.c.l.b16 %v32
    %v104 = vunpack.c.h.b16 %v32
    %v105 = vpack.c.b16 %v103, %v101
    %v106 = vpack.c.b16 %v104, %v102
    %vm109 = vcmask 130048
    %v111 = vsel %vm109, %v95, 0
    %v114 = vsel %vm109, %v96, 0
    %v117 = vsel %vm109, %v97, 0
    %v120 = vsel %vm109, %v98, 0
    %122 = vmatpush.bf16.msra.mxu0 0
    %123 = vmatpush.bf16.msra.mxu0 0
    %124 = vmatpush.bf16.msra.mxu0 0
    %125 = vmatpush.bf16.msra.mxu0 0
    %126 = vmatpush.bf16.msra.mxu0 0
    %127 = vmatpush.bf16.msra.mxu0 0
    %128 = vmatpush.bf16.msra.mxu0 0
    %129 = vmatpush.bf16.msra.mxu0 %v105
    %130 = vmatmul.bf16.gmra.mxu0 %v111
    %v131 = vpop.f32.mrf.mxu0
    %v132 = vadd.f32 %v75, %v131
    %v133 = vpop.f32.mrf.mxu0
    %v134 = vadd.f32 %v75, %v133
    %135 = vmatmul.bf16.gmra.mxu0 %v114
    %v136 = vpop.f32.mrf.mxu0
    %v137 = vadd.f32 %v75, %v136
    %v138 = vpop.f32.mrf.mxu0
    %v139 = vadd.f32 %v75, %v138
    %140 = vmatmul.bf16.gmra.mxu0 %v117
    %v141 = vpop.f32.mrf.mxu0
    %v142 = vadd.f32 %v75, %v141
    %v143 = vpop.f32.mrf.mxu0
    %v144 = vadd.f32 %v75, %v143
    %145 = vmatmul.bf16.gmra.mxu0 %v120
    %v146 = vpop.f32.mrf.mxu0
    %v147 = vadd.f32 %v75, %v146
    %v148 = vpop.f32.mrf.mxu0
    %v149 = vadd.f32 %v75, %v148
    %150 = vdwg.mxu0
    %151 = vmatpush.bf16.msra.mxu0 0
    %152 = vmatpush.bf16.msra.mxu0 0
    %153 = vmatpush.bf16.msra.mxu0 0
    %154 = vmatpush.bf16.msra.mxu0 0
    %155 = vmatpush.bf16.msra.mxu0 0
    %156 = vmatpush.bf16.msra.mxu0 0
    %157 = vmatpush.bf16.msra.mxu0 0
    %158 = vmatpush.bf16.msra.mxu0 %v106
    %159 = vmatmul.bf16.gmra.mxu0 %v111
    %v160 = vpop.f32.mrf.mxu0
    %v161 = vadd.f32 %v76, %v160
    %v162 = vpop.f32.mrf.mxu0
    %v163 = vadd.f32 %v76, %v162
    %164 = vmatmul.bf16.gmra.mxu0 %v114
    %v165 = vpop.f32.mrf.mxu0
    %v166 = vadd.f32 %v76, %v165
    %v167 = vpop.f32.mrf.mxu0
    %v168 = vadd.f32 %v76, %v167
    %169 = vmatmul.bf16.gmra.mxu0 %v117
    %v170 = vpop.f32.mrf.mxu0
    %v171 = vadd.f32 %v76, %v170
    %v172 = vpop.f32.mrf.mxu0
    %v173 = vadd.f32 %v76, %v172
    %174 = vmatmul.bf16.gmra.mxu0 %v120
    %v175 = vpop.f32.mrf.mxu0
    %v176 = vadd.f32 %v76, %v175
    %v177 = vpop.f32.mrf.mxu0
    %v178 = vadd.f32 %v76, %v177
    %179 = vdwg.mxu0
    %180 = vst [vmem:[#allocation2] sm:$0xff] %v132
    %181 = vst [vmem:[#allocation2 + $0x8] sm:$0xff] %v161
    %182 = vst [vmem:[#allocation2 + $0x10] sm:$0xff] %v134
    %183 = vst [vmem:[#allocation2 + $0x18] sm:$0xff] %v163
    %184 = vst [vmem:[#allocation2 + $0x20] sm:$0xff] %v137
    %185 = vst [vmem:[#allocation2 + $0x28] sm:$0xff] %v166
    %186 = vst [vmem:[#allocation2 + $0x30] sm:$0xff] %v139
    %187 = vst [vmem:[#allocation2 + $0x38] sm:$0xff] %v168
    %188 = vst [vmem:[#allocation2 + $0x40] sm:$0xff] %v142
    %189 = vst [vmem:[#allocation2 + $0x48] sm:$0xff] %v171
    %190 = vst [vmem:[#allocation2 + $0x50] sm:$0xff] %v144
    %191 = vst [vmem:[#allocation2 + $0x58] sm:$0xff] %v173
    %192 = vst [vmem:[#allocation2 + $0x60] sm:$0xff] %v147
    %193 = vst [vmem:[#allocation2 + $0x68] sm:$0xff] %v176
    %194 = vst [vmem:[#allocation2 + $0x70] sm:$0xff] %v149
    %195 = vst [vmem:[#allocation2 + $0x78] sm:$0xff] %v178
    %s196 = scalar_lea.vmem %s2, 1
    %v197 = vld [vmem:[%s196] ss:$8 sm:$0x3]
    %v199 = vperm.slane %v197, 0
    %v200 = vperm.slane %v197, 1
    %v203 = vld [vmem:[#allocation2] sm:$0xff]
    %v204 = vld [vmem:[#allocation2 + $0x8] sm:$0xff]
    %v213 = vunpack.c.l.b16 %v33
    %v214 = vunpack.c.h.b16 %v33
    %v215 = vunpack.c.l.b16 %v34
    %v216 = vunpack.c.h.b16 %v34
    %v217 = vunpack.c.l.b16 %v35
    %v218 = vunpack.c.h.b16 %v35
    %v219 = vunpack.c.l.b16 %v36
    %v220 = vunpack.c.h.b16 %v36
    %v221 = vunpack.c.l.b16 %v37
    %v222 = vunpack.c.h.b16 %v37
    %v223 = vunpack.c.l.b16 %v38
    %v224 = vunpack.c.h.b16 %v38
    %v225 = vunpack.c.l.b16 %v39
    %v226 = vunpack.c.h.b16 %v39
    %v227 = vunpack.c.l.b16 %v40
    %v228 = vunpack.c.h.b16 %v40
    %v229 = vpack.c.b16 %v215, %v213
    %v230 = vpack.c.b16 %v216, %v214
    %v231 = vpack.c.b16 %v219, %v217
    %v232 = vpack.c.b16 %v220, %v218
    %v233 = vpack.c.b16 %v223, %v221
    %v234 = vpack.c.b16 %v224, %v222
    %v235 = vpack.c.b16 %v227, %v225
    %v236 = vpack.c.b16 %v228, %v226
    %vm245 = vcmask 523264
    %v247 = vsel %vm245, 0, 0
    %249 = vmatpush.bf16.msra.mxu0 0
    %250 = vmatpush.bf16.msra.mxu0 0
    %251 = vmatpush.bf16.msra.mxu0 0
    %252 = vmatpush.bf16.msra.mxu0 0
    %253 = vmatpush.bf16.msra.mxu0 %v235
    %254 = vmatpush.bf16.msra.mxu0 %v233
    %255 = vmatpush.bf16.msra.mxu0 %v231
    %256 = vmatpush.bf16.msra.mxu0 %v229
    %257 = vmatmul.bf16.gmra.mxu0 %v247
    %v258 = vpop.f32.mrf.mxu0
    %v259 = vadd.f32 0.0, %v258
    %v260 = vpop.f32.mrf.mxu0
    %261 = vdwg.mxu0
    %262 = vmatpush.bf16.msra.mxu0 0
    %263 = vmatpush.bf16.msra.mxu0 0
    %264 = vmatpush.bf16.msra.mxu0 0
    %265 = vmatpush.bf16.msra.mxu0 0
    %266 = vmatpush.bf16.msra.mxu0 %v236
    %267 = vmatpush.bf16.msra.mxu0 %v234
    %268 = vmatpush.bf16.msra.mxu0 %v232
    %269 = vmatpush.bf16.msra.mxu0 %v230
    %270 = vmatmul.bf16.gmra.mxu0 %v247
    %v271 = vpop.f32.mrf.mxu0
    %v272 = vadd.f32 0.0, %v271
    %v273 = vpop.f32.mrf.mxu0
    %274 = vdwg.mxu0
    %v275 = vadd.f32 %v203, %v259
    %v276 = vadd.f32 %v204, %v272
    %v277 = vxor.u32 %v275, 2147483648
    %v278 = vxor.u32 %v276, 2147483648
    %v279 = vmul.f32 %v277, 1.442695
    %v280 = vpow.pop %v279
    %v281 = vmul.f32 %v278, 1.442695
    %v282 = vpow.pop %v281
    %v283 = vadd.f32 %v280, 1.0
    %v284 = vadd.f32 %v282, 1.0
    %v285 = vrcp.pop %v283
    %v286 = vmul.f32 %v283, %v285
    %v287 = vsub.f32 1.0, %v286
    %v288 = vmul.f32 %v285, %v287
    %v289 = vadd.f32 %v285, %v288
    %vm290 = vweird.f32 %v283
    %vm291 = vweird.f32 %v285
    %vm292 = vmor %vm290, %vm291
    %v293 = vsel %vm292, %v285, %v289
    %v294 = vand.u32 2147483647, %v283
    %vm295 = vcmp.eq.f32.partialorder %v294, 8.507059e+37
    %v296 = vand.u32 %v283, 2147483648
    %v297 = vor.u32 1.1754944e-38, %v296
    %v298 = vsel %vm295, %v297, %v293
    %v299 = vmul.f32 1.0, %v298
    %v300 = vrcp.pop %v284
    %v301 = vmul.f32 %v284, %v300
    %v302 = vsub.f32 1.0, %v301
    %v303 = vmul.f32 %v300, %v302
    %v304 = vadd.f32 %v300, %v303
    %vm305 = vweird.f32 %v284
    %vm306 = vweird.f32 %v300
    %vm307 = vmor %vm305, %vm306
    %v308 = vsel %vm307, %v300, %v304
    %v309 = vand.u32 2147483647, %v284
    %vm310 = vcmp.eq.f32.partialorder %v309, 8.507059e+37
    %v311 = vand.u32 %v284, 2147483648
    %v312 = vor.u32 1.1754944e-38, %v311
    %v313 = vsel %vm310, %v312, %v308
    %v314 = vmul.f32 1.0, %v313
    %v315 = vtanh.pop %v276
    %v316 = vmul.f32 %v299, 0.0
    %v317 = vmul.f32 %v299, %v315
    %319 = vrot.lane.b32.xlu0 %v317, 64
    %v320 = vpop.permute.xlu0 %319
    %v322 = vadd.f32 %v316, %v320
    %v323 = vtanh.pop %v322
    %v324 = vmul.f32 %v314, %v323
    %326 = vrot.lane.b32.xlu0 %v324, 64
    %v327 = vpop.permute.xlu0 %326
    %v329 = vsel %vm245, %v327, 0.0
    %v330 = vpack.c.bf16 %v329, %v329
    %v347 = vunpack.c.l.b16 %v41
    %v348 = vunpack.c.h.b16 %v41
    %v349 = vunpack.c.l.b16 %v42
    %v350 = vunpack.c.h.b16 %v42
    %v351 = vunpack.c.l.b16 %v43
    %v352 = vunpack.c.h.b16 %v43
    %v353 = vunpack.c.l.b16 %v44
    %v354 = vunpack.c.h.b16 %v44
    %v355 = vunpack.c.l.b16 %v45
    %v356 = vunpack.c.h.b16 %v45
    %v357 = vunpack.c.l.b16 %v46
    %v358 = vunpack.c.h.b16 %v46
    %v359 = vunpack.c.l.b16 %v47
    %v360 = vunpack.c.h.b16 %v47
    %v361 = vunpack.c.l.b16 %v48
    %v362 = vunpack.c.h.b16 %v48
    %v363 = vunpack.c.l.b16 %v49
    %v364 = vunpack.c.h.b16 %v49
    %v365 = vunpack.c.l.b16 %v50
    %v366 = vunpack.c.h.b16 %v50
    %v367 = vunpack.c.l.b16 %v51
    %v368 = vunpack.c.h.b16 %v51
    %v369 = vunpack.c.l.b16 %v52
    %v370 = vunpack.c.h.b16 %v52
    %v371 = vunpack.c.l.b16 %v53
    %v372 = vunpack.c.h.b16 %v53
    %v373 = vunpack.c.l.b16 %v54
    %v374 = vunpack.c.h.b16 %v54
    %v375 = vunpack.c.l.b16 %v55
    %v376 = vunpack.c.h.b16 %v55
    %v377 = vunpack.c.l.b16 %v56
    %v378 = vunpack.c.h.b16 %v56
    %v379 = vpack.c.b16 %v349, %v347
    %v380 = vpack.c.b16 %v350, %v348
    %v381 = vpack.c.b16 %v353, %v351
    %v382 = vpack.c.b16 %v354, %v352
    %v383 = vpack.c.b16 %v357, %v355
    %v384 = vpack.c.b16 %v358, %v356
    %v385 = vpack.c.b16 %v361, %v359
    %v386 = vpack.c.b16 %v362, %v360
    %v387 = vpack.c.b16 %v365, %v363
    %v388 = vpack.c.b16 %v366, %v364
    %v389 = vpack.c.b16 %v369, %v367
    %v390 = vpack.c.b16 %v370, %v368
    %v391 = vpack.c.b16 %v373, %v371
    %v392 = vpack.c.b16 %v374, %v372
    %v393 = vpack.c.b16 %v377, %v375
    %v394 = vpack.c.b16 %v378, %v376
    %411 = vmatpush.bf16.msra.mxu0 %v393
    %412 = vmatpush.bf16.msra.mxu0 %v391
    %413 = vmatpush.bf16.msra.mxu0 %v389
    %414 = vmatpush.bf16.msra.mxu0 %v387
    %415 = vmatpush.bf16.msra.mxu0 %v385
    %416 = vmatpush.bf16.msra.mxu0 %v383
    %417 = vmatpush.bf16.msra.mxu0 %v381
    %418 = vmatpush.bf16.msra.mxu0 %v379
    %419 = vmatmul.bf16.gmra.mxu0 %v330
    %v420 = vpop.f32.mrf.mxu0
    %v421 = vadd.f32 %v199, %v420
    %v422 = vpop.f32.mrf.mxu0
    %423 = vdwg.mxu0
    %424 = vmatpush.bf16.msra.mxu0 %v394
    %425 = vmatpush.bf16.msra.mxu0 %v392
    %426 = vmatpush.bf16.msra.mxu0 %v390
    %427 = vmatpush.bf16.msra.mxu0 %v388
    %428 = vmatpush.bf16.msra.mxu0 %v386
    %429 = vmatpush.bf16.msra.mxu0 %v384
    %430 = vmatpush.bf16.msra.mxu0 %v382
    %431 = vmatpush.bf16.msra.mxu0 %v380
    %432 = vmatmul.bf16.gmra.mxu0 %v330
    %v433 = vpop.f32.mrf.mxu0
    %v434 = vadd.f32 %v200, %v433
    %v435 = vpop.f32.mrf.mxu0
    %436 = vdwg.mxu0
    %v437 = vxor.u32 %v421, 2147483648
    %v438 = vxor.u32 %v434, 2147483648
    %v439 = vmul.f32 %v437, 1.442695
    %v440 = vpow.pop %v439
    %v441 = vmul.f32 %v438, 1.442695
    %v442 = vpow.pop %v441
    %v443 = vadd.f32 %v440, 1.0
    %v444 = vadd.f32 %v442, 1.0
    %v445 = vrcp.pop %v443
    %v446 = vmul.f32 %v443, %v445
    %v447 = vsub.f32 1.0, %v446
    %v448 = vmul.f32 %v445, %v447
    %v449 = vadd.f32 %v445, %v448
    %vm450 = vweird.f32 %v443
    %vm451 = vweird.f32 %v445
    %vm452 = vmor %vm450, %vm451
    %v453 = vsel %vm452, %v445, %v449
    %v454 = vand.u32 2147483647, %v443
    %vm455 = vcmp.eq.f32.partialorder %v454, 8.507059e+37
    %v456 = vand.u32 %v443, 2147483648
    %v457 = vor.u32 1.1754944e-38, %v456
    %v458 = vsel %vm455, %v457, %v453
    %v459 = vmul.f32 1.0, %v458
    %v460 = vrcp.pop %v444
    %v461 = vmul.f32 %v444, %v460
    %v462 = vsub.f32 1.0, %v461
    %v463 = vmul.f32 %v460, %v462
    %v464 = vadd.f32 %v460, %v463
    %vm465 = vweird.f32 %v444
    %vm466 = vweird.f32 %v460
    %vm467 = vmor %vm465, %vm466
    %v468 = vsel %vm467, %v460, %v464
    %v469 = vand.u32 2147483647, %v444
    %vm470 = vcmp.eq.f32.partialorder %v469, 8.507059e+37
    %v471 = vand.u32 %v444, 2147483648
    %v472 = vor.u32 1.1754944e-38, %v471
    %v473 = vsel %vm470, %v472, %v468
    %v474 = vmul.f32 1.0, %v473
    %v475 = vtanh.pop %v434
    %v476 = vmul.f32 %v459, 0.0
    %v477 = vmul.f32 %v459, %v475
    %479 = vrot.lane.b32.xlu0 %v477, 64
    %v480 = vpop.permute.xlu0 %479
    %v482 = vadd.f32 %v476, %v480
    %v483 = vtanh.pop %v482
    %v484 = vmul.f32 %v474, %v483
    %v485 = vld [vmem:[#allocation2 + $0x10] sm:$0xff]
    %v486 = vld [vmem:[#allocation2 + $0x18] sm:$0xff]
    %v487 = vpack.c.bf16 %v324, %v324
    %489 = vrot.lane.b32.xlu0 %v487, 64
    %v490 = vpop.permute.xlu0 %489
    %v492 = vsel %vm245, %v490, 0
    %494 = vmatpush.bf16.msra.mxu0 0
    %495 = vmatpush.bf16.msra.mxu0 0
    %496 = vmatpush.bf16.msra.mxu0 0
    %497 = vmatpush.bf16.msra.mxu0 0
    %498 = vmatpush.bf16.msra.mxu0 %v235
    %499 = vmatpush.bf16.msra.mxu0 %v233
    %500 = vmatpush.bf16.msra.mxu0 %v231
    %501 = vmatpush.bf16.msra.mxu0 %v229
    %502 = vmatmul.bf16.gmra.mxu0 %v492
    %v503 = vpop.f32.mrf.mxu0
    %v504 = vadd.f32 0.0, %v503
    %v505 = vpop.f32.mrf.mxu0
    %506 = vdwg.mxu0
    %507 = vmatpush.bf16.msra.mxu0 0
    %508 = vmatpush.bf16.msra.mxu0 0
    %509 = vmatpush.bf16.msra.mxu0 0
    %510 = vmatpush.bf16.msra.mxu0 0
    %511 = vmatpush.bf16.msra.mxu0 %v236
    %512 = vmatpush.bf16.msra.mxu0 %v234
    %513 = vmatpush.bf16.msra.mxu0 %v232
    %514 = vmatpush.bf16.msra.mxu0 %v230
    %515 = vmatmul.bf16.gmra.mxu0 %v492
    %v516 = vpop.f32.mrf.mxu0
    %v517 = vadd.f32 0.0, %v516
    %v518 = vpop.f32.mrf.mxu0
    %519 = vdwg.mxu0
    %v520 = vadd.f32 %v485, %v504
    %v521 = vadd.f32 %v486, %v517
    %v522 = vxor.u32 %v520, 2147483648
    %v523 = vxor.u32 %v521, 2147483648
    %v524 = vmul.f32 %v522, 1.442695
    %v525 = vpow.pop %v524
    %v526 = vmul.f32 %v523, 1.442695
    %v527 = vpow.pop %v526
    %v528 = vadd.f32 %v525, 1.0
    %v529 = vadd.f32 %v527, 1.0
    %v530 = vrcp.pop %v528
    %v531 = vmul.f32 %v528, %v530
    %v532 = vsub.f32 1.0, %v531
    %v533 = vmul.f32 %v530, %v532
    %v534 = vadd.f32 %v530, %v533
    %vm535 = vweird.f32 %v528
    %vm536 = vweird.f32 %v530
    %vm537 = vmor %vm535, %vm536
    %v538 = vsel %vm537, %v530, %v534
    %v539 = vand.u32 2147483647, %v528
    %vm540 = vcmp.eq.f32.partialorder %v539, 8.507059e+37
    %v541 = vand.u32 %v528, 2147483648
    %v542 = vor.u32 1.1754944e-38, %v541
    %v543 = vsel %vm540, %v542, %v538
    %v544 = vmul.f32 1.0, %v543
    %v545 = vrcp.pop %v529
    %v546 = vmul.f32 %v529, %v545
    %v547 = vsub.f32 1.0, %v546
    %v548 = vmul.f32 %v545, %v547
    %v549 = vadd.f32 %v545, %v548
    %vm550 = vweird.f32 %v529
    %vm551 = vweird.f32 %v545
    %vm552 = vmor %vm550, %vm551
    %v553 = vsel %vm552, %v545, %v549
    %v554 = vand.u32 2147483647, %v529
    %vm555 = vcmp.eq.f32.partialorder %v554, 8.507059e+37
    %v556 = vand.u32 %v529, 2147483648
    %v557 = vor.u32 1.1754944e-38, %v556
    %v558 = vsel %vm555, %v557, %v553
    %v559 = vmul.f32 1.0, %v558
    %v560 = vtanh.pop %v521
    %v561 = vmul.f32 %v544, %v322
    %v562 = vmul.f32 %v544, %v560
    %564 = vrot.lane.b32.xlu0 %v562, 64
    %v565 = vpop.permute.xlu0 %564
    %v567 = vadd.f32 %v561, %v565
    %v568 = vtanh.pop %v567
    %v569 = vmul.f32 %v559, %v568
    %571 = vrot.lane.b32.xlu0 %v569, 64
    %v572 = vpop.permute.xlu0 %571
    %v574 = vsel %vm245, %v572, %v484
    %v575 = vpack.c.bf16 %v574, %v574
    %576 = vmatpush.bf16.msra.mxu0 %v393
    %577 = vmatpush.bf16.msra.mxu0 %v391
    %578 = vmatpush.bf16.msra.mxu0 %v389
    %579 = vmatpush.bf16.msra.mxu0 %v387
    %580 = vmatpush.bf16.msra.mxu0 %v385
    %581 = vmatpush.bf16.msra.mxu0 %v383
    %582 = vmatpush.bf16.msra.mxu0 %v381
    %583 = vmatpush.bf16.msra.mxu0 %v379
    %584 = vmatmul.bf16.gmra.mxu0 %v575
    %v585 = vpop.f32.mrf.mxu0
    %v586 = vadd.f32 %v199, %v585
    %v587 = vpop.f32.mrf.mxu0
    %588 = vdwg.mxu0
    %589 = vmatpush.bf16.msra.mxu0 %v394
    %590 = vmatpush.bf16.msra.mxu0 %v392
    %591 = vmatpush.bf16.msra.mxu0 %v390
    %592 = vmatpush.bf16.msra.mxu0 %v388
    %593 = vmatpush.bf16.msra.mxu0 %v386
    %594 = vmatpush.bf16.msra.mxu0 %v384
    %595 = vmatpush.bf16.msra.mxu0 %v382
    %596 = vmatpush.bf16.msra.mxu0 %v380
    %597 = vmatmul.bf16.gmra.mxu0 %v575
    %v598 = vpop.f32.mrf.mxu0
    %v599 = vadd.f32 %v200, %v598
    %v600 = vpop.f32.mrf.mxu0
    %601 = vdwg.mxu0
    %v602 = vxor.u32 %v586, 2147483648
    %v603 = vxor.u32 %v599, 2147483648
    %v604 = vmul.f32 %v602, 1.442695
    %v605 = vpow.pop %v604
    %v606 = vmul.f32 %v603, 1.442695
    %v607 = vpow.pop %v606
    %v608 = vadd.f32 %v605, 1.0
    %v609 = vadd.f32 %v607, 1.0
    %v610 = vrcp.pop %v608
    %v611 = vmul.f32 %v608, %v610
    %v612 = vsub.f32 1.0, %v611
    %v613 = vmul.f32 %v610, %v612
    %v614 = vadd.f32 %v610, %v613
    %vm615 = vweird.f32 %v608
    %vm616 = vweird.f32 %v610
    %vm617 = vmor %vm615, %vm616
    %v618 = vsel %vm617, %v610, %v614
    %v619 = vand.u32 2147483647, %v608
    %vm620 = vcmp.eq.f32.partialorder %v619, 8.507059e+37
    %v621 = vand.u32 %v608, 2147483648
    %v622 = vor.u32 1.1754944e-38, %v621
    %v623 = vsel %vm620, %v622, %v618
    %v624 = vmul.f32 1.0, %v623
    %v625 = vrcp.pop %v609
    %v626 = vmul.f32 %v609, %v625
    %v627 = vsub.f32 1.0, %v626
    %v628 = vmul.f32 %v625, %v627
    %v629 = vadd.f32 %v625, %v628
    %vm630 = vweird.f32 %v609
    %vm631 = vweird.f32 %v625
    %vm632 = vmor %vm630, %vm631
    %v633 = vsel %vm632, %v625, %v629
    %v634 = vand.u32 2147483647, %v609
    %vm635 = vcmp.eq.f32.partialorder %v634, 8.507059e+37
    %v636 = vand.u32 %v609, 2147483648
    %v637 = vor.u32 1.1754944e-38, %v636
    %v638 = vsel %vm635, %v637, %v633
    %v639 = vmul.f32 1.0, %v638
    %v640 = vtanh.pop %v599
    %v641 = vmul.f32 %v624, %v482
    %v642 = vmul.f32 %v624, %v640
    %644 = vrot.lane.b32.xlu0 %v642, 64
    %v645 = vpop.permute.xlu0 %644
    %v647 = vadd.f32 %v641, %v645
    %v648 = vtanh.pop %v647
    %v649 = vmul.f32 %v639, %v648
    %v650 = vld [vmem:[#allocation2 + $0x20] sm:$0xff]
    %v651 = vld [vmem:[#allocation2 + $0x28] sm:$0xff]
    %v652 = vpack.c.bf16 %v569, %v569
    %654 = vrot.lane.b32.xlu0 %v652, 64
    %v655 = vpop.permute.xlu0 %654
    %v657 = vsel %vm245, %v655, 0
    %659 = vmatpush.bf16.msra.mxu0 0
    %660 = vmatpush.bf16.msra.mxu0 0
    %661 = vmatpush.bf16.msra.mxu0 0
    %662 = vmatpush.bf16.msra.mxu0 0
    %663 = vmatpush.bf16.msra.mxu0 %v235
    %664 = vmatpush.bf16.msra.mxu0 %v233
    %665 = vmatpush.bf16.msra.mxu0 %v231
    %666 = vmatpush.bf16.msra.mxu0 %v229
    %667 = vmatmul.bf16.gmra.mxu0 %v657
    %v668 = vpop.f32.mrf.mxu0
    %v669 = vadd.f32 0.0, %v668
    %v670 = vpop.f32.mrf.mxu0
    %671 = vdwg.mxu0
    %672 = vmatpush.bf16.msra.mxu0 0
    %673 = vmatpush.bf16.msra.mxu0 0
    %674 = vmatpush.bf16.msra.mxu0 0
    %675 = vmatpush.bf16.msra.mxu0 0
    %676 = vmatpush.bf16.msra.mxu0 %v236
    %677 = vmatpush.bf16.msra.mxu0 %v234
    %678 = vmatpush.bf16.msra.mxu0 %v232
    %679 = vmatpush.bf16.msra.mxu0 %v230
    %680 = vmatmul.bf16.gmra.mxu0 %v657
    %v681 = vpop.f32.mrf.mxu0
    %v682 = vadd.f32 0.0, %v681
    %v683 = vpop.f32.mrf.mxu0
    %684 = vdwg.mxu0
    %v685 = vadd.f32 %v650, %v669
    %v686 = vadd.f32 %v651, %v682
    %v687 = vxor.u32 %v685, 2147483648
    %v688 = vxor.u32 %v686, 2147483648
    %v689 = vmul.f32 %v687, 1.442695
    %v690 = vpow.pop %v689
    %v691 = vmul.f32 %v688, 1.442695
    %v692 = vpow.pop %v691
    %v693 = vadd.f32 %v690, 1.0
    %v694 = vadd.f32 %v692, 1.0
    %v695 = vrcp.pop %v693
    %v696 = vmul.f32 %v693, %v695
    %v697 = vsub.f32 1.0, %v696
    %v698 = vmul.f32 %v695, %v697
    %v699 = vadd.f32 %v695, %v698
    %vm700 = vweird.f32 %v693
    %vm701 = vweird.f32 %v695
    %vm702 = vmor %vm700, %vm701
    %v703 = vsel %vm702, %v695, %v699
    %v704 = vand.u32 2147483647, %v693
    %vm705 = vcmp.eq.f32.partialorder %v704, 8.507059e+37
    %v706 = vand.u32 %v693, 2147483648
    %v707 = vor.u32 1.1754944e-38, %v706
    %v708 = vsel %vm705, %v707, %v703
    %v709 = vmul.f32 1.0, %v708
    %v710 = vrcp.pop %v694
    %v711 = vmul.f32 %v694, %v710
    %v712 = vsub.f32 1.0, %v711
    %v713 = vmul.f32 %v710, %v712
    %v714 = vadd.f32 %v710, %v713
    %vm715 = vweird.f32 %v694
    %vm716 = vweird.f32 %v710
    %vm717 = vmor %vm715, %vm716
    %v718 = vsel %vm717, %v710, %v714
    %v719 = vand.u32 2147483647, %v694
    %vm720 = vcmp.eq.f32.partialorder %v719, 8.507059e+37
    %v721 = vand.u32 %v694, 2147483648
    %v722 = vor.u32 1.1754944e-38, %v721
    %v723 = vsel %vm720, %v722, %v718
    %v724 = vmul.f32 1.0, %v723
    %v725 = vtanh.pop %v686
    %v726 = vmul.f32 %v709, %v567
    %v727 = vmul.f32 %v709, %v725
    %729 = vrot.lane.b32.xlu0 %v727, 64
    %v730 = vpop.permute.xlu0 %729
    %v732 = vadd.f32 %v726, %v730
    %v733 = vtanh.pop %v732
    %v734 = vmul.f32 %v724, %v733
    %736 = vrot.lane.b32.xlu0 %v734, 64
    %v737 = vpop.permute.xlu0 %736
    %v739 = vsel %vm245, %v737, %v649
    %v740 = vpack.c.bf16 %v739, %v739
    %741 = vmatpush.bf16.msra.mxu0 %v393
    %742 = vmatpush.bf16.msra.mxu0 %v391
    %743 = vmatpush.bf16.msra.mxu0 %v389
    %744 = vmatpush.bf16.msra.mxu0 %v387
    %745 = vmatpush.bf16.msra.mxu0 %v385
    %746 = vmatpush.bf16.msra.mxu0 %v383
    %747 = vmatpush.bf16.msra.mxu0 %v381
    %748 = vmatpush.bf16.msra.mxu0 %v379
    %749 = vmatmul.bf16.gmra.mxu0 %v740
    %v750 = vpop.f32.mrf.mxu0
    %v751 = vadd.f32 %v199, %v750
    %v752 = vpop.f32.mrf.mxu0
    %753 = vdwg.mxu0
    %754 = vmatpush.bf16.msra.mxu0 %v394
    %755 = vmatpush.bf16.msra.mxu0 %v392
    %756 = vmatpush.bf16.msra.mxu0 %v390
    %757 = vmatpush.bf16.msra.mxu0 %v388
    %758 = vmatpush.bf16.msra.mxu0 %v386
    %759 = vmatpush.bf16.msra.mxu0 %v384
    %760 = vmatpush.bf16.msra.mxu0 %v382
    %761 = vmatpush.bf16.msra.mxu0 %v380
    %762 = vmatmul.bf16.gmra.mxu0 %v740
    %v763 = vpop.f32.mrf.mxu0
    %v764 = vadd.f32 %v200, %v763
    %v765 = vpop.f32.mrf.mxu0
    %766 = vdwg.mxu0
    %v767 = vxor.u32 %v751, 2147483648
    %v768 = vxor.u32 %v764, 2147483648
    %v769 = vmul.f32 %v767, 1.442695
    %v770 = vpow.pop %v769
    %v771 = vmul.f32 %v768, 1.442695
    %v772 = vpow.pop %v771
    %v773 = vadd.f32 %v770, 1.0
    %v774 = vadd.f32 %v772, 1.0
    %v775 = vrcp.pop %v773
    %v776 = vmul.f32 %v773, %v775
    %v777 = vsub.f32 1.0, %v776
    %v778 = vmul.f32 %v775, %v777
    %v779 = vadd.f32 %v775, %v778
    %vm780 = vweird.f32 %v773
    %vm781 = vweird.f32 %v775
    %vm782 = vmor %vm780, %vm781
    %v783 = vsel %vm782, %v775, %v779
    %v784 = vand.u32 2147483647, %v773
    %vm785 = vcmp.eq.f32.partialorder %v784, 8.507059e+37
    %v786 = vand.u32 %v773, 2147483648
    %v787 = vor.u32 1.1754944e-38, %v786
    %v788 = vsel %vm785, %v787, %v783
    %v789 = vmul.f32 1.0, %v788
    %v790 = vrcp.pop %v774
    %v791 = vmul.f32 %v774, %v790
    %v792 = vsub.f32 1.0, %v791
    %v793 = vmul.f32 %v790, %v792
    %v794 = vadd.f32 %v790, %v793
    %vm795 = vweird.f32 %v774
    %vm796 = vweird.f32 %v790
    %vm797 = vmor %vm795, %vm796
    %v798 = vsel %vm797, %v790, %v794
    %v799 = vand.u32 2147483647, %v774
    %vm800 = vcmp.eq.f32.partialorder %v799, 8.507059e+37
    %v801 = vand.u32 %v774, 2147483648
    %v802 = vor.u32 1.1754944e-38, %v801
    %v803 = vsel %vm800, %v802, %v798
    %v804 = vmul.f32 1.0, %v803
    %v805 = vtanh.pop %v764
    %v806 = vmul.f32 %v789, %v647
    %v807 = vmul.f32 %v789, %v805
    %809 = vrot.lane.b32.xlu0 %v807, 64
    %v810 = vpop.permute.xlu0 %809
    %v812 = vadd.f32 %v806, %v810
    %v813 = vtanh.pop %v812
    %v814 = vmul.f32 %v804, %v813
    %v815 = vld [vmem:[#allocation2 + $0x30] sm:$0xff]
    %v816 = vld [vmem:[#allocation2 + $0x38] sm:$0xff]
    %v817 = vpack.c.bf16 %v734, %v734
    %819 = vrot.lane.b32.xlu0 %v817, 64
    %v820 = vpop.permute.xlu0 %819
    %v822 = vsel %vm245, %v820, 0
    %824 = vmatpush.bf16.msra.mxu0 0
    %825 = vmatpush.bf16.msra.mxu0 0
    %826 = vmatpush.bf16.msra.mxu0 0
    %827 = vmatpush.bf16.msra.mxu0 0
    %828 = vmatpush.bf16.msra.mxu0 %v235
    %829 = vmatpush.bf16.msra.mxu0 %v233
    %830 = vmatpush.bf16.msra.mxu0 %v231
    %831 = vmatpush.bf16.msra.mxu0 %v229
    %832 = vmatmul.bf16.gmra.mxu0 %v822
    %v833 = vpop.f32.mrf.mxu0
    %v834 = vadd.f32 0.0, %v833
    %v835 = vpop.f32.mrf.mxu0
    %836 = vdwg.mxu0
    %837 = vmatpush.bf16.msra.mxu0 0
    %838 = vmatpush.bf16.msra.mxu0 0
    %839 = vmatpush.bf16.msra.mxu0 0
    %840 = vmatpush.bf16.msra.mxu0 0
    %841 = vmatpush.bf16.msra.mxu0 %v236
    %842 = vmatpush.bf16.msra.mxu0 %v234
    %843 = vmatpush.bf16.msra.mxu0 %v232
    %844 = vmatpush.bf16.msra.mxu0 %v230
    %845 = vmatmul.bf16.gmra.mxu0 %v822
    %v846 = vpop.f32.mrf.mxu0
    %v847 = vadd.f32 0.0, %v846
    %v848 = vpop.f32.mrf.mxu0
    %849 = vdwg.mxu0
    %v850 = vadd.f32 %v815, %v834
    %v851 = vadd.f32 %v816, %v847
    %v852 = vxor.u32 %v850, 2147483648
    %v853 = vxor.u32 %v851, 2147483648
    %v854 = vmul.f32 %v852, 1.442695
    %v855 = vpow.pop %v854
    %v856 = vmul.f32 %v853, 1.442695
    %v857 = vpow.pop %v856
    %v858 = vadd.f32 %v855, 1.0
    %v859 = vadd.f32 %v857, 1.0
    %v860 = vrcp.pop %v858
    %v861 = vmul.f32 %v858, %v860
    %v862 = vsub.f32 1.0, %v861
    %v863 = vmul.f32 %v860, %v862
    %v864 = vadd.f32 %v860, %v863
    %vm865 = vweird.f32 %v858
    %vm866 = vweird.f32 %v860
    %vm867 = vmor %vm865, %vm866
    %v868 = vsel %vm867, %v860, %v864
    %v869 = vand.u32 2147483647, %v858
    %vm870 = vcmp.eq.f32.partialorder %v869, 8.507059e+37
    %v871 = vand.u32 %v858, 2147483648
    %v872 = vor.u32 1.1754944e-38, %v871
    %v873 = vsel %vm870, %v872, %v868
    %v874 = vmul.f32 1.0, %v873
    %v875 = vrcp.pop %v859
    %v876 = vmul.f32 %v859, %v875
    %v877 = vsub.f32 1.0, %v876
    %v878 = vmul.f32 %v875, %v877
    %v879 = vadd.f32 %v875, %v878
    %vm880 = vweird.f32 %v859
    %vm881 = vweird.f32 %v875
    %vm882 = vmor %vm880, %vm881
    %v883 = vsel %vm882, %v875, %v879
    %v884 = vand.u32 2147483647, %v859
    %vm885 = vcmp.eq.f32.partialorder %v884, 8.507059e+37
    %v886 = vand.u32 %v859, 2147483648
    %v887 = vor.u32 1.1754944e-38, %v886
    %v888 = vsel %vm885, %v887, %v883
    %v889 = vmul.f32 1.0, %v888
    %v890 = vtanh.pop %v851
    %v891 = vmul.f32 %v874, %v732
    %v892 = vmul.f32 %v874, %v890
    %894 = vrot.lane.b32.xlu0 %v892, 64
    %v895 = vpop.permute.xlu0 %894
    %v897 = vadd.f32 %v891, %v895
    %v898 = vtanh.pop %v897
    %v899 = vmul.f32 %v889, %v898
    %901 = vrot.lane.b32.xlu0 %v899, 64
    %v902 = vpop.permute.xlu0 %901
    %v904 = vsel %vm245, %v902, %v814
    %v905 = vpack.c.bf16 %v904, %v904
    %906 = vmatpush.bf16.msra.mxu0 %v393
    %907 = vmatpush.bf16.msra.mxu0 %v391
    %908 = vmatpush.bf16.msra.mxu0 %v389
    %909 = vmatpush.bf16.msra.mxu0 %v387
    %910 = vmatpush.bf16.msra.mxu0 %v385
    %911 = vmatpush.bf16.msra.mxu0 %v383
    %912 = vmatpush.bf16.msra.mxu0 %v381
    %913 = vmatpush.bf16.msra.mxu0 %v379
    %914 = vmatmul.bf16.gmra.mxu0 %v905
    %v915 = vpop.f32.mrf.mxu0
    %v916 = vadd.f32 %v199, %v915
    %v917 = vpop.f32.mrf.mxu0
    %918 = vdwg.mxu0
    %919 = vmatpush.bf16.msra.mxu0 %v394
    %920 = vmatpush.bf16.msra.mxu0 %v392
    %921 = vmatpush.bf16.msra.mxu0 %v390
    %922 = vmatpush.bf16.msra.mxu0 %v388
    %923 = vmatpush.bf16.msra.mxu0 %v386
    %924 = vmatpush.bf16.msra.mxu0 %v384
    %925 = vmatpush.bf16.msra.mxu0 %v382
    %926 = vmatpush.bf16.msra.mxu0 %v380
    %927 = vmatmul.bf16.gmra.mxu0 %v905
    %v928 = vpop.f32.mrf.mxu0
    %v929 = vadd.f32 %v200, %v928
    %v930 = vpop.f32.mrf.mxu0
    %931 = vdwg.mxu0
    %v932 = vxor.u32 %v916, 2147483648
    %v933 = vxor.u32 %v929, 2147483648
    %v934 = vmul.f32 %v932, 1.442695
    %v935 = vpow.pop %v934
    %v936 = vmul.f32 %v933, 1.442695
    %v937 = vpow.pop %v936
    %v938 = vadd.f32 %v935, 1.0
    %v939 = vadd.f32 %v937, 1.0
    %v940 = vrcp.pop %v938
    %v941 = vmul.f32 %v938, %v940
    %v942 = vsub.f32 1.0, %v941
    %v943 = vmul.f32 %v940, %v942
    %v944 = vadd.f32 %v940, %v943
    %vm945 = vweird.f32 %v938
    %vm946 = vweird.f32 %v940
    %vm947 = vmor %vm945, %vm946
    %v948 = vsel %vm947, %v940, %v944
    %v949 = vand.u32 2147483647, %v938
    %vm950 = vcmp.eq.f32.partialorder %v949, 8.507059e+37
    %v951 = vand.u32 %v938, 2147483648
    %v952 = vor.u32 1.1754944e-38, %v951
    %v953 = vsel %vm950, %v952, %v948
    %v954 = vmul.f32 1.0, %v953
    %v955 = vrcp.pop %v939
    %v956 = vmul.f32 %v939, %v955
    %v957 = vsub.f32 1.0, %v956
    %v958 = vmul.f32 %v955, %v957
    %v959 = vadd.f32 %v955, %v958
    %vm960 = vweird.f32 %v939
    %vm961 = vweird.f32 %v955
    %vm962 = vmor %vm960, %vm961
    %v963 = vsel %vm962, %v955, %v959
    %v964 = vand.u32 2147483647, %v939
    %vm965 = vcmp.eq.f32.partialorder %v964, 8.507059e+37
    %v966 = vand.u32 %v939, 2147483648
    %v967 = vor.u32 1.1754944e-38, %v966
    %v968 = vsel %vm965, %v967, %v963
    %v969 = vmul.f32 1.0, %v968
    %v970 = vtanh.pop %v929
    %v971 = vmul.f32 %v954, %v812
    %v972 = vmul.f32 %v954, %v970
    %974 = vrot.lane.b32.xlu0 %v972, 64
    %v975 = vpop.permute.xlu0 %974
    %v977 = vadd.f32 %v971, %v975
    %v978 = vtanh.pop %v977
    %v979 = vmul.f32 %v969, %v978
    %v980 = vld [vmem:[#allocation2 + $0x40] sm:$0xff]
    %v981 = vld [vmem:[#allocation2 + $0x48] sm:$0xff]
    %v982 = vpack.c.bf16 %v899, %v899
    %984 = vrot.lane.b32.xlu0 %v982, 64
    %v985 = vpop.permute.xlu0 %984
    %v987 = vsel %vm245, %v985, 0
    %989 = vmatpush.bf16.msra.mxu0 0
    %990 = vmatpush.bf16.msra.mxu0 0
    %991 = vmatpush.bf16.msra.mxu0 0
    %992 = vmatpush.bf16.msra.mxu0 0
    %993 = vmatpush.bf16.msra.mxu0 %v235
    %994 = vmatpush.bf16.msra.mxu0 %v233
    %995 = vmatpush.bf16.msra.mxu0 %v231
    %996 = vmatpush.bf16.msra.mxu0 %v229
    %997 = vmatmul.bf16.gmra.mxu0 %v987
    %v998 = vpop.f32.mrf.mxu0
    %v999 = vadd.f32 0.0, %v998
    %v1000 = vpop.f32.mrf.mxu0
    %1001 = vdwg.mxu0
    %1002 = vmatpush.bf16.msra.mxu0 0
    %1003 = vmatpush.bf16.msra.mxu0 0
    %1004 = vmatpush.bf16.msra.mxu0 0
    %1005 = vmatpush.bf16.msra.mxu0 0
    %1006 = vmatpush.bf16.msra.mxu0 %v236
    %1007 = vmatpush.bf16.msra.mxu0 %v234
    %1008 = vmatpush.bf16.msra.mxu0 %v232
    %1009 = vmatpush.bf16.msra.mxu0 %v230
    %1010 = vmatmul.bf16.gmra.mxu0 %v987
    %v1011 = vpop.f32.mrf.mxu0
    %v1012 = vadd.f32 0.0, %v1011
    %v1013 = vpop.f32.mrf.mxu0
    %1014 = vdwg.mxu0
    %v1015 = vadd.f32 %v980, %v999
    %v1016 = vadd.f32 %v981, %v1012
    %v1017 = vxor.u32 %v1015, 2147483648
    %v1018 = vxor.u32 %v1016, 2147483648
    %v1019 = vmul.f32 %v1017, 1.442695
    %v1020 = vpow.pop %v1019
    %v1021 = vmul.f32 %v1018, 1.442695
    %v1022 = vpow.pop %v1021
    %v1023 = vadd.f32 %v1020, 1.0
    %v1024 = vadd.f32 %v1022, 1.0
    %v1025 = vrcp.pop %v1023
    %v1026 = vmul.f32 %v1023, %v1025
    %v1027 = vsub.f32 1.0, %v1026
    %v1028 = vmul.f32 %v1025, %v1027
    %v1029 = vadd.f32 %v1025, %v1028
    %vm1030 = vweird.f32 %v1023
    %vm1031 = vweird.f32 %v1025
    %vm1032 = vmor %vm1030, %vm1031
    %v1033 = vsel %vm1032, %v1025, %v1029
    %v1034 = vand.u32 2147483647, %v1023
    %vm1035 = vcmp.eq.f32.partialorder %v1034, 8.507059e+37
    %v1036 = vand.u32 %v1023, 2147483648
    %v1037 = vor.u32 1.1754944e-38, %v1036
    %v1038 = vsel %vm1035, %v1037, %v1033
    %v1039 = vmul.f32 1.0, %v1038
    %v1040 = vrcp.pop %v1024
    %v1041 = vmul.f32 %v1024, %v1040
    %v1042 = vsub.f32 1.0, %v1041
    %v1043 = vmul.f32 %v1040, %v1042
    %v1044 = vadd.f32 %v1040, %v1043
    %vm1045 = vweird.f32 %v1024
    %vm1046 = vweird.f32 %v1040
    %vm1047 = vmor %vm1045, %vm1046
    %v1048 = vsel %vm1047, %v1040, %v1044
    %v1049 = vand.u32 2147483647, %v1024
    %vm1050 = vcmp.eq.f32.partialorder %v1049, 8.507059e+37
    %v1051 = vand.u32 %v1024, 2147483648
    %v1052 = vor.u32 1.1754944e-38, %v1051
    %v1053 = vsel %vm1050, %v1052, %v1048
    %v1054 = vmul.f32 1.0, %v1053
    %v1055 = vtanh.pop %v1016
    %v1056 = vmul.f32 %v1039, %v897
    %v1057 = vmul.f32 %v1039, %v1055
    %1059 = vrot.lane.b32.xlu0 %v1057, 64
    %v1060 = vpop.permute.xlu0 %1059
    %v1062 = vadd.f32 %v1056, %v1060
    %v1063 = vtanh.pop %v1062
    %v1064 = vmul.f32 %v1054, %v1063
    %1066 = vrot.lane.b32.xlu0 %v1064, 64
    %v1067 = vpop.permute.xlu0 %1066
    %v1069 = vsel %vm245, %v1067, %v979
    %v1070 = vpack.c.bf16 %v1069, %v1069
    %1071 = vmatpush.bf16.msra.mxu0 %v393
    %1072 = vmatpush.bf16.msra.mxu0 %v391
    %1073 = vmatpush.bf16.msra.mxu0 %v389
    %1074 = vmatpush.bf16.msra.mxu0 %v387
    %1075 = vmatpush.bf16.msra.mxu0 %v385
    %1076 = vmatpush.bf16.msra.mxu0 %v383
    %1077 = vmatpush.bf16.msra.mxu0 %v381
    %1078 = vmatpush.bf16.msra.mxu0 %v379
    %1079 = vmatmul.bf16.gmra.mxu0 %v1070
    %v1080 = vpop.f32.mrf.mxu0
    %v1081 = vadd.f32 %v199, %v1080
    %v1082 = vpop.f32.mrf.mxu0
    %1083 = vdwg.mxu0
    %1084 = vmatpush.bf16.msra.mxu0 %v394
    %1085 = vmatpush.bf16.msra.mxu0 %v392
    %1086 = vmatpush.bf16.msra.mxu0 %v390
    %1087 = vmatpush.bf16.msra.mxu0 %v388
    %1088 = vmatpush.bf16.msra.mxu0 %v386
    %1089 = vmatpush.bf16.msra.mxu0 %v384
    %1090 = vmatpush.bf16.msra.mxu0 %v382
    %1091 = vmatpush.bf16.msra.mxu0 %v380
    %1092 = vmatmul.bf16.gmra.mxu0 %v1070
    %v1093 = vpop.f32.mrf.mxu0
    %v1094 = vadd.f32 %v200, %v1093
    %v1095 = vpop.f32.mrf.mxu0
    %1096 = vdwg.mxu0
    %v1097 = vxor.u32 %v1081, 2147483648
    %v1098 = vxor.u32 %v1094, 2147483648
    %v1099 = vmul.f32 %v1097, 1.442695
    %v1100 = vpow.pop %v1099
    %v1101 = vmul.f32 %v1098, 1.442695
    %v1102 = vpow.pop %v1101
    %v1103 = vadd.f32 %v1100, 1.0
    %v1104 = vadd.f32 %v1102, 1.0
    %v1105 = vrcp.pop %v1103
    %v1106 = vmul.f32 %v1103, %v1105
    %v1107 = vsub.f32 1.0, %v1106
    %v1108 = vmul.f32 %v1105, %v1107
    %v1109 = vadd.f32 %v1105, %v1108
    %vm1110 = vweird.f32 %v1103
    %vm1111 = vweird.f32 %v1105
    %vm1112 = vmor %vm1110, %vm1111
    %v1113 = vsel %vm1112, %v1105, %v1109
    %v1114 = vand.u32 2147483647, %v1103
    %vm1115 = vcmp.eq.f32.partialorder %v1114, 8.507059e+37
    %v1116 = vand.u32 %v1103, 2147483648
    %v1117 = vor.u32 1.1754944e-38, %v1116
    %v1118 = vsel %vm1115, %v1117, %v1113
    %v1119 = vmul.f32 1.0, %v1118
    %v1120 = vrcp.pop %v1104
    %v1121 = vmul.f32 %v1104, %v1120
    %v1122 = vsub.f32 1.0, %v1121
    %v1123 = vmul.f32 %v1120, %v1122
    %v1124 = vadd.f32 %v1120, %v1123
    %vm1125 = vweird.f32 %v1104
    %vm1126 = vweird.f32 %v1120
    %vm1127 = vmor %vm1125, %vm1126
    %v1128 = vsel %vm1127, %v1120, %v1124
    %v1129 = vand.u32 2147483647, %v1104
    %vm1130 = vcmp.eq.f32.partialorder %v1129, 8.507059e+37
    %v1131 = vand.u32 %v1104, 2147483648
    %v1132 = vor.u32 1.1754944e-38, %v1131
    %v1133 = vsel %vm1130, %v1132, %v1128
    %v1134 = vmul.f32 1.0, %v1133
    %v1135 = vtanh.pop %v1094
    %v1136 = vmul.f32 %v1119, %v977
    %v1137 = vmul.f32 %v1119, %v1135
    %1139 = vrot.lane.b32.xlu0 %v1137, 64
    %v1140 = vpop.permute.xlu0 %1139
    %v1142 = vadd.f32 %v1136, %v1140
    %v1143 = vtanh.pop %v1142
    %v1144 = vmul.f32 %v1134, %v1143
    %v1145 = vld [vmem:[#allocation2 + $0x50] sm:$0xff]
    %v1146 = vld [vmem:[#allocation2 + $0x58] sm:$0xff]
    %v1147 = vpack.c.bf16 %v1064, %v1064
    %1149 = vrot.lane.b32.xlu0 %v1147, 64
    %v1150 = vpop.permute.xlu0 %1149
    %v1152 = vsel %vm245, %v1150, 0
    %1154 = vmatpush.bf16.msra.mxu0 0
    %1155 = vmatpush.bf16.msra.mxu0 0
    %1156 = vmatpush.bf16.msra.mxu0 0
    %1157 = vmatpush.bf16.msra.mxu0 0
    %1158 = vmatpush.bf16.msra.mxu0 %v235
    %1159 = vmatpush.bf16.msra.mxu0 %v233
    %1160 = vmatpush.bf16.msra.mxu0 %v231
    %1161 = vmatpush.bf16.msra.mxu0 %v229
    %1162 = vmatmul.bf16.gmra.mxu0 %v1152
    %v1163 = vpop.f32.mrf.mxu0
    %v1164 = vadd.f32 0.0, %v1163
    %v1165 = vpop.f32.mrf.mxu0
    %1166 = vdwg.mxu0
    %1167 = vmatpush.bf16.msra.mxu0 0
    %1168 = vmatpush.bf16.msra.mxu0 0
    %1169 = vmatpush.bf16.msra.mxu0 0
    %1170 = vmatpush.bf16.msra.mxu0 0
    %1171 = vmatpush.bf16.msra.mxu0 %v236
    %1172 = vmatpush.bf16.msra.mxu0 %v234
    %1173 = vmatpush.bf16.msra.mxu0 %v232
    %1174 = vmatpush.bf16.msra.mxu0 %v230
    %1175 = vmatmul.bf16.gmra.mxu0 %v1152
    %v1176 = vpop.f32.mrf.mxu0
    %v1177 = vadd.f32 0.0, %v1176
    %v1178 = vpop.f32.mrf.mxu0
    %1179 = vdwg.mxu0
    %v1180 = vadd.f32 %v1145, %v1164
    %v1181 = vadd.f32 %v1146, %v1177
    %v1182 = vxor.u32 %v1180, 2147483648
    %v1183 = vxor.u32 %v1181, 2147483648
    %v1184 = vmul.f32 %v1182, 1.442695
    %v1185 = vpow.pop %v1184
    %v1186 = vmul.f32 %v1183, 1.442695
    %v1187 = vpow.pop %v1186
    %v1188 = vadd.f32 %v1185, 1.0
    %v1189 = vadd.f32 %v1187, 1.0
    %v1190 = vrcp.pop %v1188
    %v1191 = vmul.f32 %v1188, %v1190
    %v1192 = vsub.f32 1.0, %v1191
    %v1193 = vmul.f32 %v1190, %v1192
    %v1194 = vadd.f32 %v1190, %v1193
    %vm1195 = vweird.f32 %v1188
    %vm1196 = vweird.f32 %v1190
    %vm1197 = vmor %vm1195, %vm1196
    %v1198 = vsel %vm1197, %v1190, %v1194
    %v1199 = vand.u32 2147483647, %v1188
    %vm1200 = vcmp.eq.f32.partialorder %v1199, 8.507059e+37
    %v1201 = vand.u32 %v1188, 2147483648
    %v1202 = vor.u32 1.1754944e-38, %v1201
    %v1203 = vsel %vm1200, %v1202, %v1198
    %v1204 = vmul.f32 1.0, %v1203
    %v1205 = vrcp.pop %v1189
    %v1206 = vmul.f32 %v1189, %v1205
    %v1207 = vsub.f32 1.0, %v1206
    %v1208 = vmul.f32 %v1205, %v1207
    %v1209 = vadd.f32 %v1205, %v1208
    %vm1210 = vweird.f32 %v1189
    %vm1211 = vweird.f32 %v1205
    %vm1212 = vmor %vm1210, %vm1211
    %v1213 = vsel %vm1212, %v1205, %v1209
    %v1214 = vand.u32 2147483647, %v1189
    %vm1215 = vcmp.eq.f32.partialorder %v1214, 8.507059e+37
    %v1216 = vand.u32 %v1189, 2147483648
    %v1217 = vor.u32 1.1754944e-38, %v1216
    %v1218 = vsel %vm1215, %v1217, %v1213
    %v1219 = vmul.f32 1.0, %v1218
    %v1220 = vtanh.pop %v1181
    %v1221 = vmul.f32 %v1204, %v1062
    %v1222 = vmul.f32 %v1204, %v1220
    %1224 = vrot.lane.b32.xlu0 %v1222, 64
    %v1225 = vpop.permute.xlu0 %1224
    %v1227 = vadd.f32 %v1221, %v1225
    %v1228 = vtanh.pop %v1227
    %v1229 = vmul.f32 %v1219, %v1228
    %1231 = vrot.lane.b32.xlu0 %v1229, 64
    %v1232 = vpop.permute.xlu0 %1231
    %v1234 = vsel %vm245, %v1232, %v1144
    %v1235 = vpack.c.bf16 %v1234, %v1234
    %1236 = vmatpush.bf16.msra.mxu0 %v393
    %1237 = vmatpush.bf16.msra.mxu0 %v391
    %1238 = vmatpush.bf16.msra.mxu0 %v389
    %1239 = vmatpush.bf16.msra.mxu0 %v387
    %1240 = vmatpush.bf16.msra.mxu0 %v385
    %1241 = vmatpush.bf16.msra.mxu0 %v383
    %1242 = vmatpush.bf16.msra.mxu0 %v381
    %1243 = vmatpush.bf16.msra.mxu0 %v379
    %1244 = vmatmul.bf16.gmra.mxu0 %v1235
    %v1245 = vpop.f32.mrf.mxu0
    %v1246 = vadd.f32 %v199, %v1245
    %v1247 = vpop.f32.mrf.mxu0
    %1248 = vdwg.mxu0
    %1249 = vmatpush.bf16.msra.mxu0 %v394
    %1250 = vmatpush.bf16.msra.mxu0 %v392
    %1251 = vmatpush.bf16.msra.mxu0 %v390
    %1252 = vmatpush.bf16.msra.mxu0 %v388
    %1253 = vmatpush.bf16.msra.mxu0 %v386
    %1254 = vmatpush.bf16.msra.mxu0 %v384
    %1255 = vmatpush.bf16.msra.mxu0 %v382
    %1256 = vmatpush.bf16.msra.mxu0 %v380
    %1257 = vmatmul.bf16.gmra.mxu0 %v1235
    %v1258 = vpop.f32.mrf.mxu0
    %v1259 = vadd.f32 %v200, %v1258
    %v1260 = vpop.f32.mrf.mxu0
    %1261 = vdwg.mxu0
    %v1262 = vxor.u32 %v1246, 2147483648
    %v1263 = vxor.u32 %v1259, 2147483648
    %v1264 = vmul.f32 %v1262, 1.442695
    %v1265 = vpow.pop %v1264
    %v1266 = vmul.f32 %v1263, 1.442695
    %v1267 = vpow.pop %v1266
    %v1268 = vadd.f32 %v1265, 1.0
    %v1269 = vadd.f32 %v1267, 1.0
    %v1270 = vrcp.pop %v1268
    %v1271 = vmul.f32 %v1268, %v1270
    %v1272 = vsub.f32 1.0, %v1271
    %v1273 = vmul.f32 %v1270, %v1272
    %v1274 = vadd.f32 %v1270, %v1273
    %vm1275 = vweird.f32 %v1268
    %vm1276 = vweird.f32 %v1270
    %vm1277 = vmor %vm1275, %vm1276
    %v1278 = vsel %vm1277, %v1270, %v1274
    %v1279 = vand.u32 2147483647, %v1268
    %vm1280 = vcmp.eq.f32.partialorder %v1279, 8.507059e+37
    %v1281 = vand.u32 %v1268, 2147483648
    %v1282 = vor.u32 1.1754944e-38, %v1281
    %v1283 = vsel %vm1280, %v1282, %v1278
    %v1284 = vmul.f32 1.0, %v1283
    %v1285 = vrcp.pop %v1269
    %v1286 = vmul.f32 %v1269, %v1285
    %v1287 = vsub.f32 1.0, %v1286
    %v1288 = vmul.f32 %v1285, %v1287
    %v1289 = vadd.f32 %v1285, %v1288
    %vm1290 = vweird.f32 %v1269
    %vm1291 = vweird.f32 %v1285
    %vm1292 = vmor %vm1290, %vm1291
    %v1293 = vsel %vm1292, %v1285, %v1289
    %v1294 = vand.u32 2147483647, %v1269
    %vm1295 = vcmp.eq.f32.partialorder %v1294, 8.507059e+37
    %v1296 = vand.u32 %v1269, 2147483648
    %v1297 = vor.u32 1.1754944e-38, %v1296
    %v1298 = vsel %vm1295, %v1297, %v1293
    %v1299 = vmul.f32 1.0, %v1298
    %v1300 = vtanh.pop %v1259
    %v1301 = vmul.f32 %v1284, %v1142
    %v1302 = vmul.f32 %v1284, %v1300
    %1304 = vrot.lane.b32.xlu0 %v1302, 64
    %v1305 = vpop.permute.xlu0 %1304
    %v1307 = vadd.f32 %v1301, %v1305
    %v1308 = vtanh.pop %v1307
    %v1309 = vmul.f32 %v1299, %v1308
    %v1310 = vld [vmem:[#allocation2 + $0x60] sm:$0xff]
    %v1311 = vld [vmem:[#allocation2 + $0x68] sm:$0xff]
    %v1312 = vpack.c.bf16 %v1229, %v1229
    %1314 = vrot.lane.b32.xlu0 %v1312, 64
    %v1315 = vpop.permute.xlu0 %1314
    %v1317 = vsel %vm245, %v1315, 0
    %1319 = vmatpush.bf16.msra.mxu0 0
    %1320 = vmatpush.bf16.msra.mxu0 0
    %1321 = vmatpush.bf16.msra.mxu0 0
    %1322 = vmatpush.bf16.msra.mxu0 0
    %1323 = vmatpush.bf16.msra.mxu0 %v235
    %1324 = vmatpush.bf16.msra.mxu0 %v233
    %1325 = vmatpush.bf16.msra.mxu0 %v231
    %1326 = vmatpush.bf16.msra.mxu0 %v229
    %1327 = vmatmul.bf16.gmra.mxu0 %v1317
    %v1328 = vpop.f32.mrf.mxu0
    %v1329 = vadd.f32 0.0, %v1328
    %v1330 = vpop.f32.mrf.mxu0
    %1331 = vdwg.mxu0
    %1332 = vmatpush.bf16.msra.mxu0 0
    %1333 = vmatpush.bf16.msra.mxu0 0
    %1334 = vmatpush.bf16.msra.mxu0 0
    %1335 = vmatpush.bf16.msra.mxu0 0
    %1336 = vmatpush.bf16.msra.mxu0 %v236
    %1337 = vmatpush.bf16.msra.mxu0 %v234
    %1338 = vmatpush.bf16.msra.mxu0 %v232
    %1339 = vmatpush.bf16.msra.mxu0 %v230
    %1340 = vmatmul.bf16.gmra.mxu0 %v1317
    %v1341 = vpop.f32.mrf.mxu0
    %v1342 = vadd.f32 0.0, %v1341
    %v1343 = vpop.f32.mrf.mxu0
    %1344 = vdwg.mxu0
    %v1345 = vadd.f32 %v1310, %v1329
    %v1346 = vadd.f32 %v1311, %v1342
    %v1347 = vxor.u32 %v1345, 2147483648
    %v1348 = vxor.u32 %v1346, 2147483648
    %v1349 = vmul.f32 %v1347, 1.442695
    %v1350 = vpow.pop %v1349
    %v1351 = vmul.f32 %v1348, 1.442695
    %v1352 = vpow.pop %v1351
    %v1353 = vadd.f32 %v1350, 1.0
    %v1354 = vadd.f32 %v1352, 1.0
    %v1355 = vrcp.pop %v1353
    %v1356 = vmul.f32 %v1353, %v1355
    %v1357 = vsub.f32 1.0, %v1356
    %v1358 = vmul.f32 %v1355, %v1357
    %v1359 = vadd.f32 %v1355, %v1358
    %vm1360 = vweird.f32 %v1353
    %vm1361 = vweird.f32 %v1355
    %vm1362 = vmor %vm1360, %vm1361
    %v1363 = vsel %vm1362, %v1355, %v1359
    %v1364 = vand.u32 2147483647, %v1353
    %vm1365 = vcmp.eq.f32.partialorder %v1364, 8.507059e+37
    %v1366 = vand.u32 %v1353, 2147483648
    %v1367 = vor.u32 1.1754944e-38, %v1366
    %v1368 = vsel %vm1365, %v1367, %v1363
    %v1369 = vmul.f32 1.0, %v1368
    %v1370 = vrcp.pop %v1354
    %v1371 = vmul.f32 %v1354, %v1370
    %v1372 = vsub.f32 1.0, %v1371
    %v1373 = vmul.f32 %v1370, %v1372
    %v1374 = vadd.f32 %v1370, %v1373
    %vm1375 = vweird.f32 %v1354
    %vm1376 = vweird.f32 %v1370
    %vm1377 = vmor %vm1375, %vm1376
    %v1378 = vsel %vm1377, %v1370, %v1374
    %v1379 = vand.u32 2147483647, %v1354
    %vm1380 = vcmp.eq.f32.partialorder %v1379, 8.507059e+37
    %v1381 = vand.u32 %v1354, 2147483648
    %v1382 = vor.u32 1.1754944e-38, %v1381
    %v1383 = vsel %vm1380, %v1382, %v1378
    %v1384 = vmul.f32 1.0, %v1383
    %v1385 = vtanh.pop %v1346
    %v1386 = vmul.f32 %v1369, %v1227
    %v1387 = vmul.f32 %v1369, %v1385
    %1389 = vrot.lane.b32.xlu0 %v1387, 64
    %v1390 = vpop.permute.xlu0 %1389
    %v1392 = vadd.f32 %v1386, %v1390
    %v1393 = vtanh.pop %v1392
    %v1394 = vmul.f32 %v1384, %v1393
    %1396 = vrot.lane.b32.xlu0 %v1394, 64
    %v1397 = vpop.permute.xlu0 %1396
    %v1399 = vsel %vm245, %v1397, %v1309
    %v1400 = vpack.c.bf16 %v1399, %v1399
    %1401 = vmatpush.bf16.msra.mxu0 %v393
    %1402 = vmatpush.bf16.msra.mxu0 %v391
    %1403 = vmatpush.bf16.msra.mxu0 %v389
    %1404 = vmatpush.bf16.msra.mxu0 %v387
    %1405 = vmatpush.bf16.msra.mxu0 %v385
    %1406 = vmatpush.bf16.msra.mxu0 %v383
    %1407 = vmatpush.bf16.msra.mxu0 %v381
    %1408 = vmatpush.bf16.msra.mxu0 %v379
    %1409 = vmatmul.bf16.gmra.mxu0 %v1400
    %v1410 = vpop.f32.mrf.mxu0
    %v1411 = vadd.f32 %v199, %v1410
    %v1412 = vpop.f32.mrf.mxu0
    %1413 = vdwg.mxu0
    %1414 = vmatpush.bf16.msra.mxu0 %v394
    %1415 = vmatpush.bf16.msra.mxu0 %v392
    %1416 = vmatpush.bf16.msra.mxu0 %v390
    %1417 = vmatpush.bf16.msra.mxu0 %v388
    %1418 = vmatpush.bf16.msra.mxu0 %v386
    %1419 = vmatpush.bf16.msra.mxu0 %v384
    %1420 = vmatpush.bf16.msra.mxu0 %v382
    %1421 = vmatpush.bf16.msra.mxu0 %v380
    %1422 = vmatmul.bf16.gmra.mxu0 %v1400
    %v1423 = vpop.f32.mrf.mxu0
    %v1424 = vadd.f32 %v200, %v1423
    %v1425 = vpop.f32.mrf.mxu0
    %1426 = vdwg.mxu0
    %v1427 = vxor.u32 %v1411, 2147483648
    %v1428 = vxor.u32 %v1424, 2147483648
    %v1429 = vmul.f32 %v1427, 1.442695
    %v1430 = vpow.pop %v1429
    %v1431 = vmul.f32 %v1428, 1.442695
    %v1432 = vpow.pop %v1431
    %v1433 = vadd.f32 %v1430, 1.0
    %v1434 = vadd.f32 %v1432, 1.0
    %v1435 = vrcp.pop %v1433
    %v1436 = vmul.f32 %v1433, %v1435
    %v1437 = vsub.f32 1.0, %v1436
    %v1438 = vmul.f32 %v1435, %v1437
    %v1439 = vadd.f32 %v1435, %v1438
    %vm1440 = vweird.f32 %v1433
    %vm1441 = vweird.f32 %v1435
    %vm1442 = vmor %vm1440, %vm1441
    %v1443 = vsel %vm1442, %v1435, %v1439
    %v1444 = vand.u32 2147483647, %v1433
    %vm1445 = vcmp.eq.f32.partialorder %v1444, 8.507059e+37
    %v1446 = vand.u32 %v1433, 2147483648
    %v1447 = vor.u32 1.1754944e-38, %v1446
    %v1448 = vsel %vm1445, %v1447, %v1443
    %v1449 = vmul.f32 1.0, %v1448
    %v1450 = vrcp.pop %v1434
    %v1451 = vmul.f32 %v1434, %v1450
    %v1452 = vsub.f32 1.0, %v1451
    %v1453 = vmul.f32 %v1450, %v1452
    %v1454 = vadd.f32 %v1450, %v1453
    %vm1455 = vweird.f32 %v1434
    %vm1456 = vweird.f32 %v1450
    %vm1457 = vmor %vm1455, %vm1456
    %v1458 = vsel %vm1457, %v1450, %v1454
    %v1459 = vand.u32 2147483647, %v1434
    %vm1460 = vcmp.eq.f32.partialorder %v1459, 8.507059e+37
    %v1461 = vand.u32 %v1434, 2147483648
    %v1462 = vor.u32 1.1754944e-38, %v1461
    %v1463 = vsel %vm1460, %v1462, %v1458
    %v1464 = vmul.f32 1.0, %v1463
    %v1465 = vtanh.pop %v1424
    %v1466 = vmul.f32 %v1449, %v1307
    %v1467 = vmul.f32 %v1449, %v1465
    %1469 = vrot.lane.b32.xlu0 %v1467, 64
    %v1470 = vpop.permute.xlu0 %1469
    %v1472 = vadd.f32 %v1466, %v1470
    %v1473 = vtanh.pop %v1472
    %v1474 = vmul.f32 %v1464, %v1473
    %v1475 = vld [vmem:[#allocation2 + $0x70] sm:$0xff]
    %v1476 = vld [vmem:[#allocation2 + $0x78] sm:$0xff]
    %v1477 = vpack.c.bf16 %v1394, %v1394
    %1479 = vrot.lane.b32.xlu0 %v1477, 64
    %v1480 = vpop.permute.xlu0 %1479
    %v1482 = vsel %vm245, %v1480, 0
    %1484 = vmatpush.bf16.msra.mxu0 0
    %1485 = vmatpush.bf16.msra.mxu0 0
    %1486 = vmatpush.bf16.msra.mxu0 0
    %1487 = vmatpush.bf16.msra.mxu0 0
    %1488 = vmatpush.bf16.msra.mxu0 %v235
    %1489 = vmatpush.bf16.msra.mxu0 %v233
    %1490 = vmatpush.bf16.msra.mxu0 %v231
    %1491 = vmatpush.bf16.msra.mxu0 %v229
    %1492 = vmatmul.bf16.gmra.mxu0 %v1482
    %v1493 = vpop.f32.mrf.mxu0
    %v1494 = vadd.f32 0.0, %v1493
    %v1495 = vpop.f32.mrf.mxu0
    %1496 = vdwg.mxu0
    %1497 = vmatpush.bf16.msra.mxu0 0
    %1498 = vmatpush.bf16.msra.mxu0 0
    %1499 = vmatpush.bf16.msra.mxu0 0
    %1500 = vmatpush.bf16.msra.mxu0 0
    %1501 = vmatpush.bf16.msra.mxu0 %v236
    %1502 = vmatpush.bf16.msra.mxu0 %v234
    %1503 = vmatpush.bf16.msra.mxu0 %v232
    %1504 = vmatpush.bf16.msra.mxu0 %v230
    %1505 = vmatmul.bf16.gmra.mxu0 %v1482
    %v1506 = vpop.f32.mrf.mxu0
    %v1507 = vadd.f32 0.0, %v1506
    %v1508 = vpop.f32.mrf.mxu0
    %1509 = vdwg.mxu0
    %v1510 = vadd.f32 %v1475, %v1494
    %v1511 = vadd.f32 %v1476, %v1507
    %v1512 = vxor.u32 %v1510, 2147483648
    %v1513 = vxor.u32 %v1511, 2147483648
    %v1514 = vmul.f32 %v1512, 1.442695
    %v1515 = vpow.pop %v1514
    %v1516 = vmul.f32 %v1513, 1.442695
    %v1517 = vpow.pop %v1516
    %v1518 = vadd.f32 %v1515, 1.0
    %v1519 = vadd.f32 %v1517, 1.0
    %v1520 = vrcp.pop %v1518
    %v1521 = vmul.f32 %v1518, %v1520
    %v1522 = vsub.f32 1.0, %v1521
    %v1523 = vmul.f32 %v1520, %v1522
    %v1524 = vadd.f32 %v1520, %v1523
    %vm1525 = vweird.f32 %v1518
    %vm1526 = vweird.f32 %v1520
    %vm1527 = vmor %vm1525, %vm1526
    %v1528 = vsel %vm1527, %v1520, %v1524
    %v1529 = vand.u32 2147483647, %v1518
    %vm1530 = vcmp.eq.f32.partialorder %v1529, 8.507059e+37
    %v1531 = vand.u32 %v1518, 2147483648
    %v1532 = vor.u32 1.1754944e-38, %v1531
    %v1533 = vsel %vm1530, %v1532, %v1528
    %v1534 = vmul.f32 1.0, %v1533
    %v1535 = vrcp.pop %v1519
    %v1536 = vmul.f32 %v1519, %v1535
    %v1537 = vsub.f32 1.0, %v1536
    %v1538 = vmul.f32 %v1535, %v1537
    %v1539 = vadd.f32 %v1535, %v1538
    %vm1540 = vweird.f32 %v1519
    %vm1541 = vweird.f32 %v1535
    %vm1542 = vmor %vm1540, %vm1541
    %v1543 = vsel %vm1542, %v1535, %v1539
    %v1544 = vand.u32 2147483647, %v1519
    %vm1545 = vcmp.eq.f32.partialorder %v1544, 8.507059e+37
    %v1546 = vand.u32 %v1519, 2147483648
    %v1547 = vor.u32 1.1754944e-38, %v1546
    %v1548 = vsel %vm1545, %v1547, %v1543
    %v1549 = vmul.f32 1.0, %v1548
    %v1550 = vtanh.pop %v1511
    %v1551 = vmul.f32 %v1534, %v1392
    %v1552 = vmul.f32 %v1534, %v1550
    %1554 = vrot.lane.b32.xlu0 %v1552, 64
    %v1555 = vpop.permute.xlu0 %1554
    %v1557 = vadd.f32 %v1551, %v1555
    %v1558 = vtanh.pop %v1557
    %v1559 = vmul.f32 %v1549, %v1558
    %1561 = vrot.lane.b32.xlu0 %v1559, 64
    %v1562 = vpop.permute.xlu0 %1561
    %v1564 = vsel %vm245, %v1562, %v1474
    %v1565 = vpack.c.bf16 %v1564, %v1564
    %1566 = vmatpush.bf16.msra.mxu0 %v393
    %1567 = vmatpush.bf16.msra.mxu0 %v391
    %1568 = vmatpush.bf16.msra.mxu0 %v389
    %1569 = vmatpush.bf16.msra.mxu0 %v387
    %1570 = vmatpush.bf16.msra.mxu0 %v385
    %1571 = vmatpush.bf16.msra.mxu0 %v383
    %1572 = vmatpush.bf16.msra.mxu0 %v381
    %1573 = vmatpush.bf16.msra.mxu0 %v379
    %1574 = vmatmul.bf16.gmra.mxu0 %v1565
    %v1575 = vpop.f32.mrf.mxu0
    %v1576 = vadd.f32 %v199, %v1575
    %v1577 = vpop.f32.mrf.mxu0
    %1578 = vdwg.mxu0
    %1579 = vmatpush.bf16.msra.mxu0 %v394
    %1580 = vmatpush.bf16.msra.mxu0 %v392
    %1581 = vmatpush.bf16.msra.mxu0 %v390
    %1582 = vmatpush.bf16.msra.mxu0 %v388
    %1583 = vmatpush.bf16.msra.mxu0 %v386
    %1584 = vmatpush.bf16.msra.mxu0 %v384
    %1585 = vmatpush.bf16.msra.mxu0 %v382
    %1586 = vmatpush.bf16.msra.mxu0 %v380
    %1587 = vmatmul.bf16.gmra.mxu0 %v1565
    %v1588 = vpop.f32.mrf.mxu0
    %v1589 = vadd.f32 %v200, %v1588
    %v1590 = vpop.f32.mrf.mxu0
    %1591 = vdwg.mxu0
    %v1592 = vxor.u32 %v1576, 2147483648
    %v1593 = vxor.u32 %v1589, 2147483648
    %v1594 = vmul.f32 %v1592, 1.442695
    %v1595 = vpow.pop %v1594
    %v1596 = vmul.f32 %v1593, 1.442695
    %v1597 = vpow.pop %v1596
    %v1598 = vadd.f32 %v1595, 1.0
    %v1599 = vadd.f32 %v1597, 1.0
    %v1600 = vrcp.pop %v1598
    %v1601 = vmul.f32 %v1598, %v1600
    %v1602 = vsub.f32 1.0, %v1601
    %v1603 = vmul.f32 %v1600, %v1602
    %v1604 = vadd.f32 %v1600, %v1603
    %vm1605 = vweird.f32 %v1598
    %vm1606 = vweird.f32 %v1600
    %vm1607 = vmor %vm1605, %vm1606
    %v1608 = vsel %vm1607, %v1600, %v1604
    %v1609 = vand.u32 2147483647, %v1598
    %vm1610 = vcmp.eq.f32.partialorder %v1609, 8.507059e+37
    %v1611 = vand.u32 %v1598, 2147483648
    %v1612 = vor.u32 1.1754944e-38, %v1611
    %v1613 = vsel %vm1610, %v1612, %v1608
    %v1614 = vmul.f32 1.0, %v1613
    %v1615 = vrcp.pop %v1599
    %v1616 = vmul.f32 %v1599, %v1615
    %v1617 = vsub.f32 1.0, %v1616
    %v1618 = vmul.f32 %v1615, %v1617
    %v1619 = vadd.f32 %v1615, %v1618
    %vm1620 = vweird.f32 %v1599
    %vm1621 = vweird.f32 %v1615
    %vm1622 = vmor %vm1620, %vm1621
    %v1623 = vsel %vm1622, %v1615, %v1619
    %v1624 = vand.u32 2147483647, %v1599
    %vm1625 = vcmp.eq.f32.partialorder %v1624, 8.507059e+37
    %v1626 = vand.u32 %v1599, 2147483648
    %v1627 = vor.u32 1.1754944e-38, %v1626
    %v1628 = vsel %vm1625, %v1627, %v1623
    %v1629 = vmul.f32 1.0, %v1628
    %v1630 = vtanh.pop %v1589
    %v1631 = vmul.f32 %v1614, %v1472
    %v1632 = vmul.f32 %v1614, %v1630
    %1634 = vrot.lane.b32.xlu0 %v1632, 64
    %v1635 = vpop.permute.xlu0 %1634
    %v1637 = vadd.f32 %v1631, %v1635
    %v1638 = vtanh.pop %v1637
    %v1639 = vmul.f32 %v1629, %v1638
    %v1640 = vpack.c.bf16 %v1639, %v1639
    %s1641 = scalar_lea.vmem %s2, 2
    %v1642 = vld [vmem:[%s1641] ss:$8 sm:$0x3]
    %v1644 = vperm.slane %v1642, 0
    %1647 = vrot.lane.b32.xlu0 %v1640, 64
    %v1648 = vpop.permute.xlu0 %1647
    %v1657 = vunpack.c.l.b16 %v57
    %v1658 = vunpack.c.l.b16 %v58
    %v1659 = vunpack.c.l.b16 %v59
    %v1660 = vunpack.c.l.b16 %v60
    %v1661 = vunpack.c.l.b16 %v61
    %v1662 = vunpack.c.l.b16 %v62
    %v1663 = vunpack.c.l.b16 %v63
    %v1664 = vunpack.c.l.b16 %v64
    %v1665 = vpack.c.b16 %v1658, %v1657
    %v1666 = vpack.c.b16 %v1660, %v1659
    %v1667 = vpack.c.b16 %v1662, %v1661
    %v1668 = vpack.c.b16 %v1664, %v1663
    %v1674 = vsel %vm245, %v1648, 0
    %1676 = vmatpush.bf16.msra.mxu0 0
    %1677 = vmatpush.bf16.msra.mxu0 0
    %1678 = vmatpush.bf16.msra.mxu0 0
    %1679 = vmatpush.bf16.msra.mxu0 0
    %1680 = vmatpush.bf16.msra.mxu0 %v1668
    %1681 = vmatpush.bf16.msra.mxu0 %v1667
    %1682 = vmatpush.bf16.msra.mxu0 %v1666
    %1683 = vmatpush.bf16.msra.mxu0 %v1665
    %1684 = vmatmul.bf16.gmra.mxu0 %v1674
    %v1685 = vpop.f32.mrf.mxu0
    %v1686 = vadd.f32 %v1644, %v1685
    %v1687 = vpop.f32.mrf.mxu0
    %1688 = vdwg.mxu0
    %vm1689 = vcmask 15360
    %1690 = vst.msk [vmem:[%s3] sm:$0xff] %vm1689, %v1686
    // Predicated region
    $region18: #{tpu_custom_call.1} parent=1 // pred_check
      _
    $region19: #{tpu_custom_call.1} parent=1 // pred_check_branch
      %1692 = sbr.rel (0) target = $region21
    $region20: #{tpu_custom_call.1} parent=1 // pred_region
      _
    $region21: #{tpu_custom_call.1} parent=1 // pred_fallthru
      _
    // Predicated region
    $region22: #{tpu_custom_call.1} parent=1 // pred_check
      _
    $region23: #{tpu_custom_call.1} parent=1 // pred_check_branch
      %1694 = sbr.rel (0) target = $region25
    $region24: #{tpu_custom_call.1} parent=1 // pred_region
      _
    $region25: #{tpu_custom_call.1} parent=1 // pred_fallthru
      _
    %1695 = vsyncpa [#allocation4], 1

</llo_original>
